<compile_context>
chip_gen: v7x
topology: tpu7x:2x2x1
jax: 0.10.0
libtpu: 0.0.40
codegen_flags: <defaults>
</compile_context>

<pallas_src>
import jax
import jax.numpy as jnp
from jax import lax
from jax.experimental import pallas as pl
from jax.experimental.pallas import tpu as pltpu


def _sigmoid_eup(v):
    # tanh-based logistic: keeps the transcendental on the EUP slot instead of a
    # VPU divide/Newton path; matches jax.nn.sigmoid to f32 ulps.
    return 0.5 * jnp.tanh(0.5 * v) + 0.5


def _lstm_recurrence_kernel(xp_ref,     # (T, B, 4H)  precomputed x @ wih0 + b0
                            whh0_ref,   # (H, 4H)     layer-0 recurrent weights
                            w1c_ref,    # (2H, 4H)    fused [wih1; whh1]
                            b1_ref,     # (1, 4H)     layer-1 bias (b_ih + b_hh)
                            hout_ref):  # (B, H)      last hidden state of layer 1
    T, B, G = xp_ref.shape
    H = G // 4

    whh0 = whh0_ref[...]
    w1c = w1c_ref[...]
    b1 = b1_ref[...]

    def gates(z):
        # Two full-(B,4H)-vreg transcendental passes, then slice per gate.
        # PyTorch gate order: [i, f, g, o].
        sz = _sigmoid_eup(z)
        tz = jnp.tanh(z)
        i = sz[:, 0 * H:1 * H]
        f = sz[:, 1 * H:2 * H]
        g = tz[:, 2 * H:3 * H]
        o = sz[:, 3 * H:4 * H]
        return i, f, g, o

    def step(t, carry):
        h0, c0, h1, c1 = carry

        # Layer 0: x_t @ wih0 + b0 is hoisted (xp_ref); only the recurrent dot
        # remains on the per-step critical path.
        z0 = xp_ref[t] + jnp.dot(h0, whh0, preferred_element_type=jnp.float32)
        i0, f0, g0, o0 = gates(z0)
        c0n = f0 * c0 + i0 * g0
        h0n = o0 * jnp.tanh(c0n)

        # TODO(synk): nn.LSTM inter-layer dropout (p=0.2) is active only in
        # training mode; omitted here (inference semantics).

        # Layer 1: single fused (B, 2H) x (2H, 4H) MXU dot.
        z1 = jnp.dot(jnp.concatenate([h0n, h1], axis=1), w1c,
                     preferred_element_type=jnp.float32) + b1
        i1, f1, g1, o1 = gates(z1)
        c1n = f1 * c1 + i1 * g1
        h1n = o1 * jnp.tanh(c1n)

        return h0n, c0n, h1n, c1n

    zeros = jnp.zeros((B, H), jnp.float32)
    _, _, h1, _ = lax.fori_loop(0, T, step, (zeros, zeros, zeros, zeros),
                                unroll=True)
    hout_ref[...] = h1


def lstm_forward(x, params):
    """x: (B, T, F) batch_first float32. Returns (B, output_size)."""
    B, T, F = x.shape
    H = params["whh0"].shape[0]

    x_tm = jnp.transpose(x, (1, 0, 2))                                   # (T, B, F)
    # Hoisted layer-0 input projection for all timesteps in one batched matmul.
    x_proj = jnp.einsum("tbf,fg->tbg", x_tm, params["wih0"]) + params["b0"]

    h_last = pl.pallas_call(
        _lstm_recurrence_kernel,
        out_shape=jax.ShapeDtypeStruct((B, H), jnp.float32),
        grid=(1,),
        in_specs=[
            pl.BlockSpec((T, B, 4 * H), lambda i: (0, 0, 0)),
            pl.BlockSpec((H, 4 * H), lambda i: (0, 0)),
            pl.BlockSpec((2 * H, 4 * H), lambda i: (0, 0)),
            pl.BlockSpec((1, 4 * H), lambda i: (0, 0)),
        ],
        out_specs=pl.BlockSpec((B, H), lambda i: (0, 0)),
        compiler_params=pltpu.CompilerParams(
            dimension_semantics=("arbitrary",)),
    )(x_proj, params["whh0"], params["w1cat"], params["b1"])

    # Epilogue (BatchNorm1d eval, folded) + Linear + Sigmoid: O(B*H) flops; left
    # to XLA so the kernel's output store stays lane-dense (B, H), not (B, 1).
    y = h_last * params["bn_scale"] + params["bn_shift"]
    return jax.nn.sigmoid(y @ params["wlin"] + params["blin"])


def make_params(key, input_size=5, hidden_size=64, output_size=1):
    """Deterministic parameter init matching the PyTorch module's shapes.

    PyTorch layouts: weight_ih_l* is (4H, in), weight_hh_l* is (4H, H); here they
    are stored pre-transposed so the kernel does `x @ W`.  b_ih + b_hh are folded.
    Layer-1 weights are additionally pre-concatenated as [wih1; whh1] (2H, 4H).
    BatchNorm (eval) is folded: scale = gamma/sqrt(var+eps), shift = beta - mean*scale.
    """
    H, F, O = hidden_size, input_size, output_size
    k = 1.0 / jnp.sqrt(jnp.asarray(H, jnp.float32))
    keys = jax.random.split(key, 12)
    u = lambda kk, shape: jax.random.uniform(kk, shape, jnp.float32, -k, k)

    wih0 = u(keys[0], (F, 4 * H))
    whh0 = u(keys[1], (H, 4 * H))
    b0 = u(keys[2], (1, 4 * H)) + u(keys[3], (1, 4 * H))   # b_ih_l0 + b_hh_l0
    wih1 = u(keys[4], (H, 4 * H))
    whh1 = u(keys[5], (H, 4 * H))
    b1 = u(keys[6], (1, 4 * H)) + u(keys[7], (1, 4 * H))   # b_ih_l1 + b_hh_l1
    w1cat = jnp.concatenate([wih1, whh1], axis=0)          # (2H, 4H) fused

    # BatchNorm1d fresh-module stats: running_mean=0, running_var=1, gamma=1, beta=0.
    gamma = jnp.ones((1, H), jnp.float32)
    beta = jnp.zeros((1, H), jnp.float32)
    run_mean = jnp.zeros((1, H), jnp.float32)
    run_var = jnp.ones((1, H), jnp.float32)
    eps = 1e-5
    bn_scale = gamma / jnp.sqrt(run_var + eps)
    bn_shift = beta - run_mean * bn_scale

    wlin = jax.random.uniform(keys[8], (H, O), jnp.float32, -k, k)
    blin = jax.random.uniform(keys[9], (1, O), jnp.float32, -k, k)

    return dict(wih0=wih0, whh0=whh0, b0=b0,
                wih1=wih1, whh1=whh1, b1=b1, w1cat=w1cat,
                bn_scale=bn_scale, bn_shift=bn_shift,
                wlin=wlin, blin=blin)


def lstm_forward_ref(x, params):
    """Pure-JAX reference (same inference semantics) for correctness check."""
    B, T, F = x.shape
    H = params["whh0"].shape[0]

    def cell(inp, h, c, wih, whh, b):
        z = inp @ wih + h @ whh + b
        i = jax.nn.sigmoid(z[:, 0 * H:1 * H])
        f = jax.nn.sigmoid(z[:, 1 * H:2 * H])
        g = jnp.tanh(z[:, 2 * H:3 * H])
        o = jax.nn.sigmoid(z[:, 3 * H:4 * H])
        c_new = f * c + i * g
        return o * jnp.tanh(c_new), c_new

    def step(carry, x_t):
        h0, c0, h1, c1 = carry
        h0, c0 = cell(x_t, h0, c0, params["wih0"], params["whh0"], params["b0"])
        h1, c1 = cell(h0, h1, c1, params["wih1"], params["whh1"], params["b1"])
        return (h0, c0, h1, c1), None

    zeros = jnp.zeros((B, H), jnp.float32)
    (h0, c0, h1, c1), _ = lax.scan(step, (zeros, zeros, zeros, zeros),
                                   jnp.transpose(x, (1, 0, 2)))
    y = h1 * params["bn_scale"] + params["bn_shift"]
    return jax.nn.sigmoid(y @ params["wlin"] + params["blin"])


if __name__ == "__main__":
    key = jax.random.PRNGKey(0)
    k_x, k_p = jax.random.split(key)

    B, T, F = 8, 8, 5          # batch, seq_len, input_size (module: input_size=5)
    H, O = 64, 1               # hidden_size=64, output_size=1

    x = jax.random.normal(k_x, (B, T, F), jnp.float32)
    params = make_params(k_p, input_size=F, hidden_size=H, output_size=O)

    out = jax.block_until_ready(jax.jit(lstm_forward)(x, params))
    ref = jax.block_until_ready(lstm_forward_ref(x, params))

    assert out.shape == (B, O), out.shape
    assert jnp.allclose(out, ref, atol=2e-5, rtol=2e-5), (out, ref)
    print("KERNEL_OK")
</pallas_src>

<mosaic_0001>
module attributes {stable_mosaic.version = 11 : i64} {
  func.func @_lstm_recurrence_kernel(%arg0: i32, %arg1: memref<8x8x256xf32, #tpu.memory_space<vmem>>, %arg2: memref<64x256xf32, #tpu.memory_space<vmem>>, %arg3: memref<128x256xf32, #tpu.memory_space<vmem>>, %arg4: memref<1x256xf32, #tpu.memory_space<vmem>>, %arg5: memref<8x64xf32, #tpu.memory_space<vmem>>) attributes {dimension_semantics = [#tpu.dimension_semantics<arbitrary>], iteration_bounds = array<i64: 1>, scalar_prefetch = 0 : i64, scratch_operands = 0 : i64, tpu.core_type = #tpu.core_type<tc>, window_params = [{pipeline_mode = #tpu.pipeline_mode<synchronous>, transform_indices = @transform_0, window_bounds = array<i64: 8, 8, 256>}, {pipeline_mode = #tpu.pipeline_mode<synchronous>, transform_indices = @transform_1, window_bounds = array<i64: 64, 256>}, {pipeline_mode = #tpu.pipeline_mode<synchronous>, transform_indices = @transform_2, window_bounds = array<i64: 128, 256>}, {pipeline_mode = #tpu.pipeline_mode<synchronous>, transform_indices = @transform_3, window_bounds = array<i64: 1, 256>}, {pipeline_mode = #tpu.pipeline_mode<synchronous>, transform_indices = @transform_4, window_bounds = array<i64: 8, 64>}]} {
    %c0 = arith.constant 0 : index
    %c0_0 = arith.constant 0 : index
    %0 = vector.load %arg2[%c0, %c0_0] : memref<64x256xf32, #tpu.memory_space<vmem>>, vector<64x256xf32>
    %c0_1 = arith.constant 0 : index
    %c0_2 = arith.constant 0 : index
    %1 = vector.load %arg3[%c0_1, %c0_2] : memref<128x256xf32, #tpu.memory_space<vmem>>, vector<128x256xf32>
    %c0_3 = arith.constant 0 : index
    %c0_4 = arith.constant 0 : index
    %2 = vector.load %arg4[%c0_3, %c0_4] : memref<1x256xf32, #tpu.memory_space<vmem>>, vector<1x256xf32>
    %cst = arith.constant 0.000000e+00 : f32
    %3 = vector.broadcast %cst : f32 to vector<8x64xf32>
    %c0_i32 = arith.constant 0 : i32
    %4 = arith.index_cast %c0_i32 : i32 to index
    %c0_5 = arith.constant 0 : index
    %c0_6 = arith.constant 0 : index
    %5 = vector.load %arg1[%4, %c0_5, %c0_6] : memref<8x8x256xf32, #tpu.memory_space<vmem>>, vector<1x8x256xf32>
    %6 = vector.shape_cast %5 : vector<1x8x256xf32> to vector<8x256xf32>
    %cst_7 = arith.constant dense<0.000000e+00> : vector<8x256xf32>
    %7 = tpu.matmul %3, %0, %cst_7 {dimension_numbers = #tpu.dot_dimension_numbers<[1], [0], [0], [1], [0, 0, 1, 1], [], []>} : vector<8x64xf32>, vector<64x256xf32>, vector<8x256xf32> -> vector<8x256xf32>
    %8 = arith.addf %6, %7 : vector<8x256xf32>
    %cst_8 = arith.constant 5.000000e-01 : f32
    %9 = vector.broadcast %cst_8 : f32 to vector<8x256xf32>
    %10 = arith.mulf %9, %8 : vector<8x256xf32>
    %11 = math.tanh %10 : vector<8x256xf32>
    %cst_9 = arith.constant 5.000000e-01 : f32
    %12 = vector.broadcast %cst_9 : f32 to vector<8x256xf32>
    %13 = arith.mulf %12, %11 : vector<8x256xf32>
    %cst_10 = arith.constant 5.000000e-01 : f32
    %14 = vector.broadcast %cst_10 : f32 to vector<8x256xf32>
    %15 = arith.addf %13, %14 : vector<8x256xf32>
    %16 = math.tanh %8 : vector<8x256xf32>
    %17 = vector.extract_strided_slice %15 {offsets = [0, 0], sizes = [8, 64], strides = [1, 1]} : vector<8x256xf32> to vector<8x64xf32>
    %18 = vector.extract_strided_slice %15 {offsets = [0, 64], sizes = [8, 64], strides = [1, 1]} : vector<8x256xf32> to vector<8x64xf32>
    %19 = vector.extract_strided_slice %16 {offsets = [0, 128], sizes = [8, 64], strides = [1, 1]} : vector<8x256xf32> to vector<8x64xf32>
    %20 = vector.extract_strided_slice %15 {offsets = [0, 192], sizes = [8, 64], strides = [1, 1]} : vector<8x256xf32> to vector<8x64xf32>
    %21 = arith.mulf %18, %3 : vector<8x64xf32>
    %22 = arith.mulf %17, %19 : vector<8x64xf32>
    %23 = arith.addf %21, %22 : vector<8x64xf32>
    %24 = math.tanh %23 : vector<8x64xf32>
    %25 = arith.mulf %20, %24 : vector<8x64xf32>
    %26 = tpu.concatenate %25, %3 in 1 : vector<8x64xf32>, vector<8x64xf32> -> vector<8x128xf32>
    %cst_11 = arith.constant dense<0.000000e+00> : vector<8x256xf32>
    %27 = tpu.matmul %26, %1, %cst_11 {dimension_numbers = #tpu.dot_dimension_numbers<[1], [0], [0], [1], [0, 0, 1, 1], [], []>} : vector<8x128xf32>, vector<128x256xf32>, vector<8x256xf32> -> vector<8x256xf32>
    %28 = vector.broadcast %2 : vector<1x256xf32> to vector<8x256xf32>
    %29 = arith.addf %27, %28 : vector<8x256xf32>
    %cst_12 = arith.constant 5.000000e-01 : f32
    %30 = vector.broadcast %cst_12 : f32 to vector<8x256xf32>
    %31 = arith.mulf %30, %29 : vector<8x256xf32>
    %32 = math.tanh %31 : vector<8x256xf32>
    %cst_13 = arith.constant 5.000000e-01 : f32
    %33 = vector.broadcast %cst_13 : f32 to vector<8x256xf32>
    %34 = arith.mulf %33, %32 : vector<8x256xf32>
    %cst_14 = arith.constant 5.000000e-01 : f32
    %35 = vector.broadcast %cst_14 : f32 to vector<8x256xf32>
    %36 = arith.addf %34, %35 : vector<8x256xf32>
    %37 = math.tanh %29 : vector<8x256xf32>
    %38 = vector.extract_strided_slice %36 {offsets = [0, 0], sizes = [8, 64], strides = [1, 1]} : vector<8x256xf32> to vector<8x64xf32>
    %39 = vector.extract_strided_slice %36 {offsets = [0, 64], sizes = [8, 64], strides = [1, 1]} : vector<8x256xf32> to vector<8x64xf32>
    %40 = vector.extract_strided_slice %37 {offsets = [0, 128], sizes = [8, 64], strides = [1, 1]} : vector<8x256xf32> to vector<8x64xf32>
    %41 = vector.extract_strided_slice %36 {offsets = [0, 192], sizes = [8, 64], strides = [1, 1]} : vector<8x256xf32> to vector<8x64xf32>
    %42 = arith.mulf %39, %3 : vector<8x64xf32>
    %43 = arith.mulf %38, %40 : vector<8x64xf32>
    %44 = arith.addf %42, %43 : vector<8x64xf32>
    %45 = math.tanh %44 : vector<8x64xf32>
    %46 = arith.mulf %41, %45 : vector<8x64xf32>
    %c1_i32 = arith.constant 1 : i32
    %47 = arith.index_cast %c1_i32 : i32 to index
    %c0_15 = arith.constant 0 : index
    %c0_16 = arith.constant 0 : index
    %48 = vector.load %arg1[%47, %c0_15, %c0_16] : memref<8x8x256xf32, #tpu.memory_space<vmem>>, vector<1x8x256xf32>
    %49 = vector.shape_cast %48 : vector<1x8x256xf32> to vector<8x256xf32>
    %cst_17 = arith.constant dense<0.000000e+00> : vector<8x256xf32>
    %50 = tpu.matmul %25, %0, %cst_17 {dimension_numbers = #tpu.dot_dimension_numbers<[1], [0], [0], [1], [0, 0, 1, 1], [], []>} : vector<8x64xf32>, vector<64x256xf32>, vector<8x256xf32> -> vector<8x256xf32>
    %51 = arith.addf %49, %50 : vector<8x256xf32>
    %cst_18 = arith.constant 5.000000e-01 : f32
    %52 = vector.broadcast %cst_18 : f32 to vector<8x256xf32>
    %53 = arith.mulf %52, %51 : vector<8x256xf32>
    %54 = math.tanh %53 : vector<8x256xf32>
    %cst_19 = arith.constant 5.000000e-01 : f32
    %55 = vector.broadcast %cst_19 : f32 to vector<8x256xf32>
    %56 = arith.mulf %55, %54 : vector<8x256xf32>
    %cst_20 = arith.constant 5.000000e-01 : f32
    %57 = vector.broadcast %cst_20 : f32 to vector<8x256xf32>
    %58 = arith.addf %56, %57 : vector<8x256xf32>
    %59 = math.tanh %51 : vector<8x256xf32>
    %60 = vector.extract_strided_slice %58 {offsets = [0, 0], sizes = [8, 64], strides = [1, 1]} : vector<8x256xf32> to vector<8x64xf32>
    %61 = vector.extract_strided_slice %58 {offsets = [0, 64], sizes = [8, 64], strides = [1, 1]} : vector<8x256xf32> to vector<8x64xf32>
    %62 = vector.extract_strided_slice %59 {offsets = [0, 128], sizes = [8, 64], strides = [1, 1]} : vector<8x256xf32> to vector<8x64xf32>
    %63 = vector.extract_strided_slice %58 {offsets = [0, 192], sizes = [8, 64], strides = [1, 1]} : vector<8x256xf32> to vector<8x64xf32>
    %64 = arith.mulf %61, %23 : vector<8x64xf32>
    %65 = arith.mulf %60, %62 : vector<8x64xf32>
    %66 = arith.addf %64, %65 : vector<8x64xf32>
    %67 = math.tanh %66 : vector<8x64xf32>
    %68 = arith.mulf %63, %67 : vector<8x64xf32>
    %69 = tpu.concatenate %68, %46 in 1 : vector<8x64xf32>, vector<8x64xf32> -> vector<8x128xf32>
    %cst_21 = arith.constant dense<0.000000e+00> : vector<8x256xf32>
    %70 = tpu.matmul %69, %1, %cst_21 {dimension_numbers = #tpu.dot_dimension_numbers<[1], [0], [0], [1], [0, 0, 1, 1], [], []>} : vector<8x128xf32>, vector<128x256xf32>, vector<8x256xf32> -> vector<8x256xf32>
    %71 = vector.broadcast %2 : vector<1x256xf32> to vector<8x256xf32>
    %72 = arith.addf %70, %71 : vector<8x256xf32>
    %cst_22 = arith.constant 5.000000e-01 : f32
    %73 = vector.broadcast %cst_22 : f32 to vector<8x256xf32>
    %74 = arith.mulf %73, %72 : vector<8x256xf32>
    %75 = math.tanh %74 : vector<8x256xf32>
    %cst_23 = arith.constant 5.000000e-01 : f32
    %76 = vector.broadcast %cst_23 : f32 to vector<8x256xf32>
    %77 = arith.mulf %76, %75 : vector<8x256xf32>
    %cst_24 = arith.constant 5.000000e-01 : f32
    %78 = vector.broadcast %cst_24 : f32 to vector<8x256xf32>
    %79 = arith.addf %77, %78 : vector<8x256xf32>
    %80 = math.tanh %72 : vector<8x256xf32>
    %81 = vector.extract_strided_slice %79 {offsets = [0, 0], sizes = [8, 64], strides = [1, 1]} : vector<8x256xf32> to vector<8x64xf32>
    %82 = vector.extract_strided_slice %79 {offsets = [0, 64], sizes = [8, 64], strides = [1, 1]} : vector<8x256xf32> to vector<8x64xf32>
    %83 = vector.extract_strided_slice %80 {offsets = [0, 128], sizes = [8, 64], strides = [1, 1]} : vector<8x256xf32> to vector<8x64xf32>
    %84 = vector.extract_strided_slice %79 {offsets = [0, 192], sizes = [8, 64], strides = [1, 1]} : vector<8x256xf32> to vector<8x64xf32>
    %85 = arith.mulf %82, %44 : vector<8x64xf32>
    %86 = arith.mulf %81, %83 : vector<8x64xf32>
    %87 = arith.addf %85, %86 : vector<8x64xf32>
    %88 = math.tanh %87 : vector<8x64xf32>
    %89 = arith.mulf %84, %88 : vector<8x64xf32>
    %c2_i32 = arith.constant 2 : i32
    %90 = arith.index_cast %c2_i32 : i32 to index
    %c0_25 = arith.constant 0 : index
    %c0_26 = arith.constant 0 : index
    %91 = vector.load %arg1[%90, %c0_25, %c0_26] : memref<8x8x256xf32, #tpu.memory_space<vmem>>, vector<1x8x256xf32>
    %92 = vector.shape_cast %91 : vector<1x8x256xf32> to vector<8x256xf32>
    %cst_27 = arith.constant dense<0.000000e+00> : vector<8x256xf32>
    %93 = tpu.matmul %68, %0, %cst_27 {dimension_numbers = #tpu.dot_dimension_numbers<[1], [0], [0], [1], [0, 0, 1, 1], [], []>} : vector<8x64xf32>, vector<64x256xf32>, vector<8x256xf32> -> vector<8x256xf32>
    %94 = arith.addf %92, %93 : vector<8x256xf32>
    %cst_28 = arith.constant 5.000000e-01 : f32
    %95 = vector.broadcast %cst_28 : f32 to vector<8x256xf32>
    %96 = arith.mulf %95, %94 : vector<8x256xf32>
    %97 = math.tanh %96 : vector<8x256xf32>
    %cst_29 = arith.constant 5.000000e-01 : f32
    %98 = vector.broadcast %cst_29 : f32 to vector<8x256xf32>
    %99 = arith.mulf %98, %97 : vector<8x256xf32>
    %cst_30 = arith.constant 5.000000e-01 : f32
    %100 = vector.broadcast %cst_30 : f32 to vector<8x256xf32>
    %101 = arith.addf %99, %100 : vector<8x256xf32>
    %102 = math.tanh %94 : vector<8x256xf32>
    %103 = vector.extract_strided_slice %101 {offsets = [0, 0], sizes = [8, 64], strides = [1, 1]} : vector<8x256xf32> to vector<8x64xf32>
    %104 = vector.extract_strided_slice %101 {offsets = [0, 64], sizes = [8, 64], strides = [1, 1]} : vector<8x256xf32> to vector<8x64xf32>
    %105 = vector.extract_strided_slice %102 {offsets = [0, 128], sizes = [8, 64], strides = [1, 1]} : vector<8x256xf32> to vector<8x64xf32>
    %106 = vector.extract_strided_slice %101 {offsets = [0, 192], sizes = [8, 64], strides = [1, 1]} : vector<8x256xf32> to vector<8x64xf32>
    %107 = arith.mulf %104, %66 : vector<8x64xf32>
    %108 = arith.mulf %103, %105 : vector<8x64xf32>
    %109 = arith.addf %107, %108 : vector<8x64xf32>
    %110 = math.tanh %109 : vector<8x64xf32>
    %111 = arith.mulf %106, %110 : vector<8x64xf32>
    %112 = tpu.concatenate %111, %89 in 1 : vector<8x64xf32>, vector<8x64xf32> -> vector<8x128xf32>
    %cst_31 = arith.constant dense<0.000000e+00> : vector<8x256xf32>
    %113 = tpu.matmul %112, %1, %cst_31 {dimension_numbers = #tpu.dot_dimension_numbers<[1], [0], [0], [1], [0, 0, 1, 1], [], []>} : vector<8x128xf32>, vector<128x256xf32>, vector<8x256xf32> -> vector<8x256xf32>
    %114 = vector.broadcast %2 : vector<1x256xf32> to vector<8x256xf32>
    %115 = arith.addf %113, %114 : vector<8x256xf32>
    %cst_32 = arith.constant 5.000000e-01 : f32
    %116 = vector.broadcast %cst_32 : f32 to vector<8x256xf32>
    %117 = arith.mulf %116, %115 : vector<8x256xf32>
    %118 = math.tanh %117 : vector<8x256xf32>
    %cst_33 = arith.constant 5.000000e-01 : f32
    %119 = vector.broadcast %cst_33 : f32 to vector<8x256xf32>
    %120 = arith.mulf %119, %118 : vector<8x256xf32>
    %cst_34 = arith.constant 5.000000e-01 : f32
    %121 = vector.broadcast %cst_34 : f32 to vector<8x256xf32>
    %122 = arith.addf %120, %121 : vector<8x256xf32>
    %123 = math.tanh %115 : vector<8x256xf32>
    %124 = vector.extract_strided_slice %122 {offsets = [0, 0], sizes = [8, 64], strides = [1, 1]} : vector<8x256xf32> to vector<8x64xf32>
    %125 = vector.extract_strided_slice %122 {offsets = [0, 64], sizes = [8, 64], strides = [1, 1]} : vector<8x256xf32> to vector<8x64xf32>
    %126 = vector.extract_strided_slice %123 {offsets = [0, 128], sizes = [8, 64], strides = [1, 1]} : vector<8x256xf32> to vector<8x64xf32>
    %127 = vector.extract_strided_slice %122 {offsets = [0, 192], sizes = [8, 64], strides = [1, 1]} : vector<8x256xf32> to vector<8x64xf32>
    %128 = arith.mulf %125, %87 : vector<8x64xf32>
    %129 = arith.mulf %124, %126 : vector<8x64xf32>
    %130 = arith.addf %128, %129 : vector<8x64xf32>
    %131 = math.tanh %130 : vector<8x64xf32>
    %132 = arith.mulf %127, %131 : vector<8x64xf32>
    %c3_i32 = arith.constant 3 : i32
    %133 = arith.index_cast %c3_i32 : i32 to index
    %c0_35 = arith.constant 0 : index
    %c0_36 = arith.constant 0 : index
    %134 = vector.load %arg1[%133, %c0_35, %c0_36] : memref<8x8x256xf32, #tpu.memory_space<vmem>>, vector<1x8x256xf32>
    %135 = vector.shape_cast %134 : vector<1x8x256xf32> to vector<8x256xf32>
    %cst_37 = arith.constant dense<0.000000e+00> : vector<8x256xf32>
    %136 = tpu.matmul %111, %0, %cst_37 {dimension_numbers = #tpu.dot_dimension_numbers<[1], [0], [0], [1], [0, 0, 1, 1], [], []>} : vector<8x64xf32>, vector<64x256xf32>, vector<8x256xf32> -> vector<8x256xf32>
    %137 = arith.addf %135, %136 : vector<8x256xf32>
    %cst_38 = arith.constant 5.000000e-01 : f32
    %138 = vector.broadcast %cst_38 : f32 to vector<8x256xf32>
    %139 = arith.mulf %138, %137 : vector<8x256xf32>
    %140 = math.tanh %139 : vector<8x256xf32>
    %cst_39 = arith.constant 5.000000e-01 : f32
    %141 = vector.broadcast %cst_39 : f32 to vector<8x256xf32>
    %142 = arith.mulf %141, %140 : vector<8x256xf32>
    %cst_40 = arith.constant 5.000000e-01 : f32
    %143 = vector.broadcast %cst_40 : f32 to vector<8x256xf32>
    %144 = arith.addf %142, %143 : vector<8x256xf32>
    %145 = math.tanh %137 : vector<8x256xf32>
    %146 = vector.extract_strided_slice %144 {offsets = [0, 0], sizes = [8, 64], strides = [1, 1]} : vector<8x256xf32> to vector<8x64xf32>
    %147 = vector.extract_strided_slice %144 {offsets = [0, 64], sizes = [8, 64], strides = [1, 1]} : vector<8x256xf32> to vector<8x64xf32>
    %148 = vector.extract_strided_slice %145 {offsets = [0, 128], sizes = [8, 64], strides = [1, 1]} : vector<8x256xf32> to vector<8x64xf32>
    %149 = vector.extract_strided_slice %144 {offsets = [0, 192], sizes = [8, 64], strides = [1, 1]} : vector<8x256xf32> to vector<8x64xf32>
    %150 = arith.mulf %147, %109 : vector<8x64xf32>
    %151 = arith.mulf %146, %148 : vector<8x64xf32>
    %152 = arith.addf %150, %151 : vector<8x64xf32>
    %153 = math.tanh %152 : vector<8x64xf32>
    %154 = arith.mulf %149, %153 : vector<8x64xf32>
    %155 = tpu.concatenate %154, %132 in 1 : vector<8x64xf32>, vector<8x64xf32> -> vector<8x128xf32>
    %cst_41 = arith.constant dense<0.000000e+00> : vector<8x256xf32>
    %156 = tpu.matmul %155, %1, %cst_41 {dimension_numbers = #tpu.dot_dimension_numbers<[1], [0], [0], [1], [0, 0, 1, 1], [], []>} : vector<8x128xf32>, vector<128x256xf32>, vector<8x256xf32> -> vector<8x256xf32>
    %157 = vector.broadcast %2 : vector<1x256xf32> to vector<8x256xf32>
    %158 = arith.addf %156, %157 : vector<8x256xf32>
    %cst_42 = arith.constant 5.000000e-01 : f32
    %159 = vector.broadcast %cst_42 : f32 to vector<8x256xf32>
    %160 = arith.mulf %159, %158 : vector<8x256xf32>
    %161 = math.tanh %160 : vector<8x256xf32>
    %cst_43 = arith.constant 5.000000e-01 : f32
    %162 = vector.broadcast %cst_43 : f32 to vector<8x256xf32>
    %163 = arith.mulf %162, %161 : vector<8x256xf32>
    %cst_44 = arith.constant 5.000000e-01 : f32
    %164 = vector.broadcast %cst_44 : f32 to vector<8x256xf32>
    %165 = arith.addf %163, %164 : vector<8x256xf32>
    %166 = math.tanh %158 : vector<8x256xf32>
    %167 = vector.extract_strided_slice %165 {offsets = [0, 0], sizes = [8, 64], strides = [1, 1]} : vector<8x256xf32> to vector<8x64xf32>
    %168 = vector.extract_strided_slice %165 {offsets = [0, 64], sizes = [8, 64], strides = [1, 1]} : vector<8x256xf32> to vector<8x64xf32>
    %169 = vector.extract_strided_slice %166 {offsets = [0, 128], sizes = [8, 64], strides = [1, 1]} : vector<8x256xf32> to vector<8x64xf32>
    %170 = vector.extract_strided_slice %165 {offsets = [0, 192], sizes = [8, 64], strides = [1, 1]} : vector<8x256xf32> to vector<8x64xf32>
    %171 = arith.mulf %168, %130 : vector<8x64xf32>
    %172 = arith.mulf %167, %169 : vector<8x64xf32>
    %173 = arith.addf %171, %172 : vector<8x64xf32>
    %174 = math.tanh %173 : vector<8x64xf32>
    %175 = arith.mulf %170, %174 : vector<8x64xf32>
    %c4_i32 = arith.constant 4 : i32
    %176 = arith.index_cast %c4_i32 : i32 to index
    %c0_45 = arith.constant 0 : index
    %c0_46 = arith.constant 0 : index
    %177 = vector.load %arg1[%176, %c0_45, %c0_46] : memref<8x8x256xf32, #tpu.memory_space<vmem>>, vector<1x8x256xf32>
    %178 = vector.shape_cast %177 : vector<1x8x256xf32> to vector<8x256xf32>
    %cst_47 = arith.constant dense<0.000000e+00> : vector<8x256xf32>
    %179 = tpu.matmul %154, %0, %cst_47 {dimension_numbers = #tpu.dot_dimension_numbers<[1], [0], [0], [1], [0, 0, 1, 1], [], []>} : vector<8x64xf32>, vector<64x256xf32>, vector<8x256xf32> -> vector<8x256xf32>
    %180 = arith.addf %178, %179 : vector<8x256xf32>
    %cst_48 = arith.constant 5.000000e-01 : f32
    %181 = vector.broadcast %cst_48 : f32 to vector<8x256xf32>
    %182 = arith.mulf %181, %180 : vector<8x256xf32>
    %183 = math.tanh %182 : vector<8x256xf32>
    %cst_49 = arith.constant 5.000000e-01 : f32
    %184 = vector.broadcast %cst_49 : f32 to vector<8x256xf32>
    %185 = arith.mulf %184, %183 : vector<8x256xf32>
    %cst_50 = arith.constant 5.000000e-01 : f32
    %186 = vector.broadcast %cst_50 : f32 to vector<8x256xf32>
    %187 = arith.addf %185, %186 : vector<8x256xf32>
    %188 = math.tanh %180 : vector<8x256xf32>
    %189 = vector.extract_strided_slice %187 {offsets = [0, 0], sizes = [8, 64], strides = [1, 1]} : vector<8x256xf32> to vector<8x64xf32>
    %190 = vector.extract_strided_slice %187 {offsets = [0, 64], sizes = [8, 64], strides = [1, 1]} : vector<8x256xf32> to vector<8x64xf32>
    %191 = vector.extract_strided_slice %188 {offsets = [0, 128], sizes = [8, 64], strides = [1, 1]} : vector<8x256xf32> to vector<8x64xf32>
    %192 = vector.extract_strided_slice %187 {offsets = [0, 192], sizes = [8, 64], strides = [1, 1]} : vector<8x256xf32> to vector<8x64xf32>
    %193 = arith.mulf %190, %152 : vector<8x64xf32>
    %194 = arith.mulf %189, %191 : vector<8x64xf32>
    %195 = arith.addf %193, %194 : vector<8x64xf32>
    %196 = math.tanh %195 : vector<8x64xf32>
    %197 = arith.mulf %192, %196 : vector<8x64xf32>
    %198 = tpu.concatenate %197, %175 in 1 : vector<8x64xf32>, vector<8x64xf32> -> vector<8x128xf32>
    %cst_51 = arith.constant dense<0.000000e+00> : vector<8x256xf32>
    %199 = tpu.matmul %198, %1, %cst_51 {dimension_numbers = #tpu.dot_dimension_numbers<[1], [0], [0], [1], [0, 0, 1, 1], [], []>} : vector<8x128xf32>, vector<128x256xf32>, vector<8x256xf32> -> vector<8x256xf32>
    %200 = vector.broadcast %2 : vector<1x256xf32> to vector<8x256xf32>
    %201 = arith.addf %199, %200 : vector<8x256xf32>
    %cst_52 = arith.constant 5.000000e-01 : f32
    %202 = vector.broadcast %cst_52 : f32 to vector<8x256xf32>
    %203 = arith.mulf %202, %201 : vector<8x256xf32>
    %204 = math.tanh %203 : vector<8x256xf32>
    %cst_53 = arith.constant 5.000000e-01 : f32
    %205 = vector.broadcast %cst_53 : f32 to vector<8x256xf32>
    %206 = arith.mulf %205, %204 : vector<8x256xf32>
    %cst_54 = arith.constant 5.000000e-01 : f32
    %207 = vector.broadcast %cst_54 : f32 to vector<8x256xf32>
    %208 = arith.addf %206, %207 : vector<8x256xf32>
    %209 = math.tanh %201 : vector<8x256xf32>
    %210 = vector.extract_strided_slice %208 {offsets = [0, 0], sizes = [8, 64], strides = [1, 1]} : vector<8x256xf32> to vector<8x64xf32>
    %211 = vector.extract_strided_slice %208 {offsets = [0, 64], sizes = [8, 64], strides = [1, 1]} : vector<8x256xf32> to vector<8x64xf32>
    %212 = vector.extract_strided_slice %209 {offsets = [0, 128], sizes = [8, 64], strides = [1, 1]} : vector<8x256xf32> to vector<8x64xf32>
    %213 = vector.extract_strided_slice %208 {offsets = [0, 192], sizes = [8, 64], strides = [1, 1]} : vector<8x256xf32> to vector<8x64xf32>
    %214 = arith.mulf %211, %173 : vector<8x64xf32>
    %215 = arith.mulf %210, %212 : vector<8x64xf32>
    %216 = arith.addf %214, %215 : vector<8x64xf32>
    %217 = math.tanh %216 : vector<8x64xf32>
    %218 = arith.mulf %213, %217 : vector<8x64xf32>
    %c5_i32 = arith.constant 5 : i32
    %219 = arith.index_cast %c5_i32 : i32 to index
    %c0_55 = arith.constant 0 : index
    %c0_56 = arith.constant 0 : index
    %220 = vector.load %arg1[%219, %c0_55, %c0_56] : memref<8x8x256xf32, #tpu.memory_space<vmem>>, vector<1x8x256xf32>
    %221 = vector.shape_cast %220 : vector<1x8x256xf32> to vector<8x256xf32>
    %cst_57 = arith.constant dense<0.000000e+00> : vector<8x256xf32>
    %222 = tpu.matmul %197, %0, %cst_57 {dimension_numbers = #tpu.dot_dimension_numbers<[1], [0], [0], [1], [0, 0, 1, 1], [], []>} : vector<8x64xf32>, vector<64x256xf32>, vector<8x256xf32> -> vector<8x256xf32>
    %223 = arith.addf %221, %222 : vector<8x256xf32>
    %cst_58 = arith.constant 5.000000e-01 : f32
    %224 = vector.broadcast %cst_58 : f32 to vector<8x256xf32>
    %225 = arith.mulf %224, %223 : vector<8x256xf32>
    %226 = math.tanh %225 : vector<8x256xf32>
    %cst_59 = arith.constant 5.000000e-01 : f32
    %227 = vector.broadcast %cst_59 : f32 to vector<8x256xf32>
    %228 = arith.mulf %227, %226 : vector<8x256xf32>
    %cst_60 = arith.constant 5.000000e-01 : f32
    %229 = vector.broadcast %cst_60 : f32 to vector<8x256xf32>
    %230 = arith.addf %228, %229 : vector<8x256xf32>
    %231 = math.tanh %223 : vector<8x256xf32>
    %232 = vector.extract_strided_slice %230 {offsets = [0, 0], sizes = [8, 64], strides = [1, 1]} : vector<8x256xf32> to vector<8x64xf32>
    %233 = vector.extract_strided_slice %230 {offsets = [0, 64], sizes = [8, 64], strides = [1, 1]} : vector<8x256xf32> to vector<8x64xf32>
    %234 = vector.extract_strided_slice %231 {offsets = [0, 128], sizes = [8, 64], strides = [1, 1]} : vector<8x256xf32> to vector<8x64xf32>
    %235 = vector.extract_strided_slice %230 {offsets = [0, 192], sizes = [8, 64], strides = [1, 1]} : vector<8x256xf32> to vector<8x64xf32>
    %236 = arith.mulf %233, %195 : vector<8x64xf32>
    %237 = arith.mulf %232, %234 : vector<8x64xf32>
    %238 = arith.addf %236, %237 : vector<8x64xf32>
    %239 = math.tanh %238 : vector<8x64xf32>
    %240 = arith.mulf %235, %239 : vector<8x64xf32>
    %241 = tpu.concatenate %240, %218 in 1 : vector<8x64xf32>, vector<8x64xf32> -> vector<8x128xf32>
    %cst_61 = arith.constant dense<0.000000e+00> : vector<8x256xf32>
    %242 = tpu.matmul %241, %1, %cst_61 {dimension_numbers = #tpu.dot_dimension_numbers<[1], [0], [0], [1], [0, 0, 1, 1], [], []>} : vector<8x128xf32>, vector<128x256xf32>, vector<8x256xf32> -> vector<8x256xf32>
    %243 = vector.broadcast %2 : vector<1x256xf32> to vector<8x256xf32>
    %244 = arith.addf %242, %243 : vector<8x256xf32>
    %cst_62 = arith.constant 5.000000e-01 : f32
    %245 = vector.broadcast %cst_62 : f32 to vector<8x256xf32>
    %246 = arith.mulf %245, %244 : vector<8x256xf32>
    %247 = math.tanh %246 : vector<8x256xf32>
    %cst_63 = arith.constant 5.000000e-01 : f32
    %248 = vector.broadcast %cst_63 : f32 to vector<8x256xf32>
    %249 = arith.mulf %248, %247 : vector<8x256xf32>
    %cst_64 = arith.constant 5.000000e-01 : f32
    %250 = vector.broadcast %cst_64 : f32 to vector<8x256xf32>
    %251 = arith.addf %249, %250 : vector<8x256xf32>
    %252 = math.tanh %244 : vector<8x256xf32>
    %253 = vector.extract_strided_slice %251 {offsets = [0, 0], sizes = [8, 64], strides = [1, 1]} : vector<8x256xf32> to vector<8x64xf32>
    %254 = vector.extract_strided_slice %251 {offsets = [0, 64], sizes = [8, 64], strides = [1, 1]} : vector<8x256xf32> to vector<8x64xf32>
    %255 = vector.extract_strided_slice %252 {offsets = [0, 128], sizes = [8, 64], strides = [1, 1]} : vector<8x256xf32> to vector<8x64xf32>
    %256 = vector.extract_strided_slice %251 {offsets = [0, 192], sizes = [8, 64], strides = [1, 1]} : vector<8x256xf32> to vector<8x64xf32>
    %257 = arith.mulf %254, %216 : vector<8x64xf32>
    %258 = arith.mulf %253, %255 : vector<8x64xf32>
    %259 = arith.addf %257, %258 : vector<8x64xf32>
    %260 = math.tanh %259 : vector<8x64xf32>
    %261 = arith.mulf %256, %260 : vector<8x64xf32>
    %c6_i32 = arith.constant 6 : i32
    %262 = arith.index_cast %c6_i32 : i32 to index
    %c0_65 = arith.constant 0 : index
    %c0_66 = arith.constant 0 : index
    %263 = vector.load %arg1[%262, %c0_65, %c0_66] : memref<8x8x256xf32, #tpu.memory_space<vmem>>, vector<1x8x256xf32>
    %264 = vector.shape_cast %263 : vector<1x8x256xf32> to vector<8x256xf32>
    %cst_67 = arith.constant dense<0.000000e+00> : vector<8x256xf32>
    %265 = tpu.matmul %240, %0, %cst_67 {dimension_numbers = #tpu.dot_dimension_numbers<[1], [0], [0], [1], [0, 0, 1, 1], [], []>} : vector<8x64xf32>, vector<64x256xf32>, vector<8x256xf32> -> vector<8x256xf32>
    %266 = arith.addf %264, %265 : vector<8x256xf32>
    %cst_68 = arith.constant 5.000000e-01 : f32
    %267 = vector.broadcast %cst_68 : f32 to vector<8x256xf32>
    %268 = arith.mulf %267, %266 : vector<8x256xf32>
    %269 = math.tanh %268 : vector<8x256xf32>
    %cst_69 = arith.constant 5.000000e-01 : f32
    %270 = vector.broadcast %cst_69 : f32 to vector<8x256xf32>
    %271 = arith.mulf %270, %269 : vector<8x256xf32>
    %cst_70 = arith.constant 5.000000e-01 : f32
    %272 = vector.broadcast %cst_70 : f32 to vector<8x256xf32>
    %273 = arith.addf %271, %272 : vector<8x256xf32>
    %274 = math.tanh %266 : vector<8x256xf32>
    %275 = vector.extract_strided_slice %273 {offsets = [0, 0], sizes = [8, 64], strides = [1, 1]} : vector<8x256xf32> to vector<8x64xf32>
    %276 = vector.extract_strided_slice %273 {offsets = [0, 64], sizes = [8, 64], strides = [1, 1]} : vector<8x256xf32> to vector<8x64xf32>
    %277 = vector.extract_strided_slice %274 {offsets = [0, 128], sizes = [8, 64], strides = [1, 1]} : vector<8x256xf32> to vector<8x64xf32>
    %278 = vector.extract_strided_slice %273 {offsets = [0, 192], sizes = [8, 64], strides = [1, 1]} : vector<8x256xf32> to vector<8x64xf32>
    %279 = arith.mulf %276, %238 : vector<8x64xf32>
    %280 = arith.mulf %275, %277 : vector<8x64xf32>
    %281 = arith.addf %279, %280 : vector<8x64xf32>
    %282 = math.tanh %281 : vector<8x64xf32>
    %283 = arith.mulf %278, %282 : vector<8x64xf32>
    %284 = tpu.concatenate %283, %261 in 1 : vector<8x64xf32>, vector<8x64xf32> -> vector<8x128xf32>
    %cst_71 = arith.constant dense<0.000000e+00> : vector<8x256xf32>
    %285 = tpu.matmul %284, %1, %cst_71 {dimension_numbers = #tpu.dot_dimension_numbers<[1], [0], [0], [1], [0, 0, 1, 1], [], []>} : vector<8x128xf32>, vector<128x256xf32>, vector<8x256xf32> -> vector<8x256xf32>
    %286 = vector.broadcast %2 : vector<1x256xf32> to vector<8x256xf32>
    %287 = arith.addf %285, %286 : vector<8x256xf32>
    %cst_72 = arith.constant 5.000000e-01 : f32
    %288 = vector.broadcast %cst_72 : f32 to vector<8x256xf32>
    %289 = arith.mulf %288, %287 : vector<8x256xf32>
    %290 = math.tanh %289 : vector<8x256xf32>
    %cst_73 = arith.constant 5.000000e-01 : f32
    %291 = vector.broadcast %cst_73 : f32 to vector<8x256xf32>
    %292 = arith.mulf %291, %290 : vector<8x256xf32>
    %cst_74 = arith.constant 5.000000e-01 : f32
    %293 = vector.broadcast %cst_74 : f32 to vector<8x256xf32>
    %294 = arith.addf %292, %293 : vector<8x256xf32>
    %295 = math.tanh %287 : vector<8x256xf32>
    %296 = vector.extract_strided_slice %294 {offsets = [0, 0], sizes = [8, 64], strides = [1, 1]} : vector<8x256xf32> to vector<8x64xf32>
    %297 = vector.extract_strided_slice %294 {offsets = [0, 64], sizes = [8, 64], strides = [1, 1]} : vector<8x256xf32> to vector<8x64xf32>
    %298 = vector.extract_strided_slice %295 {offsets = [0, 128], sizes = [8, 64], strides = [1, 1]} : vector<8x256xf32> to vector<8x64xf32>
    %299 = vector.extract_strided_slice %294 {offsets = [0, 192], sizes = [8, 64], strides = [1, 1]} : vector<8x256xf32> to vector<8x64xf32>
    %300 = arith.mulf %297, %259 : vector<8x64xf32>
    %301 = arith.mulf %296, %298 : vector<8x64xf32>
    %302 = arith.addf %300, %301 : vector<8x64xf32>
    %303 = math.tanh %302 : vector<8x64xf32>
    %304 = arith.mulf %299, %303 : vector<8x64xf32>
    %c7_i32 = arith.constant 7 : i32
    %305 = arith.index_cast %c7_i32 : i32 to index
    %c0_75 = arith.constant 0 : index
    %c0_76 = arith.constant 0 : index
    %306 = vector.load %arg1[%305, %c0_75, %c0_76] : memref<8x8x256xf32, #tpu.memory_space<vmem>>, vector<1x8x256xf32>
    %307 = vector.shape_cast %306 : vector<1x8x256xf32> to vector<8x256xf32>
    %cst_77 = arith.constant dense<0.000000e+00> : vector<8x256xf32>
    %308 = tpu.matmul %283, %0, %cst_77 {dimension_numbers = #tpu.dot_dimension_numbers<[1], [0], [0], [1], [0, 0, 1, 1], [], []>} : vector<8x64xf32>, vector<64x256xf32>, vector<8x256xf32> -> vector<8x256xf32>
    %309 = arith.addf %307, %308 : vector<8x256xf32>
    %cst_78 = arith.constant 5.000000e-01 : f32
    %310 = vector.broadcast %cst_78 : f32 to vector<8x256xf32>
    %311 = arith.mulf %310, %309 : vector<8x256xf32>
    %312 = math.tanh %311 : vector<8x256xf32>
    %cst_79 = arith.constant 5.000000e-01 : f32
    %313 = vector.broadcast %cst_79 : f32 to vector<8x256xf32>
    %314 = arith.mulf %313, %312 : vector<8x256xf32>
    %cst_80 = arith.constant 5.000000e-01 : f32
    %315 = vector.broadcast %cst_80 : f32 to vector<8x256xf32>
    %316 = arith.addf %314, %315 : vector<8x256xf32>
    %317 = math.tanh %309 : vector<8x256xf32>
    %318 = vector.extract_strided_slice %316 {offsets = [0, 0], sizes = [8, 64], strides = [1, 1]} : vector<8x256xf32> to vector<8x64xf32>
    %319 = vector.extract_strided_slice %316 {offsets = [0, 64], sizes = [8, 64], strides = [1, 1]} : vector<8x256xf32> to vector<8x64xf32>
    %320 = vector.extract_strided_slice %317 {offsets = [0, 128], sizes = [8, 64], strides = [1, 1]} : vector<8x256xf32> to vector<8x64xf32>
    %321 = vector.extract_strided_slice %316 {offsets = [0, 192], sizes = [8, 64], strides = [1, 1]} : vector<8x256xf32> to vector<8x64xf32>
    %322 = arith.mulf %319, %281 : vector<8x64xf32>
    %323 = arith.mulf %318, %320 : vector<8x64xf32>
    %324 = arith.addf %322, %323 : vector<8x64xf32>
    %325 = math.tanh %324 : vector<8x64xf32>
    %326 = arith.mulf %321, %325 : vector<8x64xf32>
    %327 = tpu.concatenate %326, %304 in 1 : vector<8x64xf32>, vector<8x64xf32> -> vector<8x128xf32>
    %cst_81 = arith.constant dense<0.000000e+00> : vector<8x256xf32>
    %328 = tpu.matmul %327, %1, %cst_81 {dimension_numbers = #tpu.dot_dimension_numbers<[1], [0], [0], [1], [0, 0, 1, 1], [], []>} : vector<8x128xf32>, vector<128x256xf32>, vector<8x256xf32> -> vector<8x256xf32>
    %329 = vector.broadcast %2 : vector<1x256xf32> to vector<8x256xf32>
    %330 = arith.addf %328, %329 : vector<8x256xf32>
    %cst_82 = arith.constant 5.000000e-01 : f32
    %331 = vector.broadcast %cst_82 : f32 to vector<8x256xf32>
    %332 = arith.mulf %331, %330 : vector<8x256xf32>
    %333 = math.tanh %332 : vector<8x256xf32>
    %cst_83 = arith.constant 5.000000e-01 : f32
    %334 = vector.broadcast %cst_83 : f32 to vector<8x256xf32>
    %335 = arith.mulf %334, %333 : vector<8x256xf32>
    %cst_84 = arith.constant 5.000000e-01 : f32
    %336 = vector.broadcast %cst_84 : f32 to vector<8x256xf32>
    %337 = arith.addf %335, %336 : vector<8x256xf32>
    %338 = math.tanh %330 : vector<8x256xf32>
    %339 = vector.extract_strided_slice %337 {offsets = [0, 0], sizes = [8, 64], strides = [1, 1]} : vector<8x256xf32> to vector<8x64xf32>
    %340 = vector.extract_strided_slice %337 {offsets = [0, 64], sizes = [8, 64], strides = [1, 1]} : vector<8x256xf32> to vector<8x64xf32>
    %341 = vector.extract_strided_slice %338 {offsets = [0, 128], sizes = [8, 64], strides = [1, 1]} : vector<8x256xf32> to vector<8x64xf32>
    %342 = vector.extract_strided_slice %337 {offsets = [0, 192], sizes = [8, 64], strides = [1, 1]} : vector<8x256xf32> to vector<8x64xf32>
    %343 = arith.mulf %340, %302 : vector<8x64xf32>
    %344 = arith.mulf %339, %341 : vector<8x64xf32>
    %345 = arith.addf %343, %344 : vector<8x64xf32>
    %346 = math.tanh %345 : vector<8x64xf32>
    %347 = arith.mulf %342, %346 : vector<8x64xf32>
    %c8_i32 = arith.constant 8 : i32
    %c0_85 = arith.constant 0 : index
    %c0_86 = arith.constant 0 : index
    %348 = vector.load %arg5[%c0_85, %c0_86] : memref<8x64xf32, #tpu.memory_space<vmem>>, vector<8x64xf32>
    tpu.vector_store %arg5[%c0_85, %c0_86], %347 {strides = array<i32>} : memref<8x64xf32, #tpu.memory_space<vmem>>, vector<8x64xf32>,
    return
  }
  func.func @transform_0(%arg0: i32) -> (i32, i32, i32) {
    %c0_i32 = arith.constant 0 : i32
    %c0_i32_0 = arith.constant 0 : i32
    %c0_i32_1 = arith.constant 0 : i32
    %c0_i32_2 = arith.constant 0 : i32
    return %c0_i32, %c0_i32_0, %c0_i32_1 : i32, i32, i32
  }
  func.func @transform_1(%arg0: i32) -> (i32, i32) {
    %c0_i32 = arith.constant 0 : i32
    %c0_i32_0 = arith.constant 0 : i32
    %c0_i32_1 = arith.constant 0 : i32
    return %c0_i32, %c0_i32_0 : i32, i32
  }
  func.func @transform_2(%arg0: i32) -> (i32, i32) {
    %c0_i32 = arith.constant 0 : i32
    %c0_i32_0 = arith.constant 0 : i32
    %c0_i32_1 = arith.constant 0 : i32
    return %c0_i32, %c0_i32_0 : i32, i32
  }
  func.func @transform_3(%arg0: i32) -> (i32, i32) {
    %c0_i32 = arith.constant 0 : i32
    %c0_i32_0 = arith.constant 0 : i32
    %c0_i32_1 = arith.constant 0 : i32
    return %c0_i32, %c0_i32_0 : i32, i32
  }
  func.func @transform_4(%arg0: i32) -> (i32, i32) {
    %c0_i32 = arith.constant 0 : i32
    %c0_i32_0 = arith.constant 0 : i32
    %c0_i32_1 = arith.constant 0 : i32
    return %c0_i32, %c0_i32_0 : i32, i32
  }
}

</mosaic_0001>

<llo_original>
// kernel: lstm_forward.1
$region0: #{lstm_forward.1}
  #allocation0 [shape = 'u32[]', space=smem, size = 0x4, offset = 0x4, fixed_abs, tag = 'smem constant byte address 0x4 - core index']
  #allocation1 [shape = 'u32[144,128]{1,0:T(1,128)}', space=vmem, size = 0x12000, scoped, tag = 'internal scratch']
  %s0 = inlined_call_operand.vmem [shape: f32[8,8,256], index: 0, kind: input, shape index: {}]
  %s1 = inlined_call_operand.hbm [shape: f32[64,256], index: 1, kind: input, shape index: {}]
  %s2 = inlined_call_operand.vmem [shape: f32[128,256], index: 2, kind: input, shape index: {}]
  %s3 = inlined_call_operand.vmem [shape: f32[1,256], index: 3, kind: input, shape index: {}]
  %s4 = inlined_call_operand.vmem [shape: f32[8,64], index: 4, kind: output, shape index: {}]
  %s5 = sld [smem:[#allocation0]]
  $region30: #{lstm_forward.1} parent=0
    _
  %s7 = ssub.s32 1, %s5
  %s8 = scalar_select 0, %s7, %s5
  $region1: #{lstm_forward.1} parent=0
    #allocation2 [shape = 'u8[65536]{0}', space=vmem, size = 0x10000, scoped, tag = 'input window, operand 1, single buffered']
    #allocation3 [shape = 's32[1]{0}', space=sflag, size = 0x4, scoped, tag = 'scoped memory for lstm_forward.1']
    %9 = vsyncpa [#allocation3], 0
    // Predicated region
    $region2: #{lstm_forward.1} parent=1 // pred_check
      _
    $region3: #{lstm_forward.1} parent=1 // pred_check_branch
      %11 = sbr.rel (0) target = $region5
    $region4: #{lstm_forward.1} parent=1 // pred_region
      _
    $region5: #{lstm_forward.1} parent=1 // pred_fallthru
      _
    // Predicated region
    $region6: #{lstm_forward.1} parent=1 // pred_check
      _
    $region7: #{lstm_forward.1} parent=1 // pred_check_branch
      %13 = sbr.rel (0) target = $region9
    $region8: #{lstm_forward.1} parent=1 // pred_region
      %s15 = ssub.s32 2048, 2048
      %16 = vsyncadd [#allocation3], %s15
      %s17 = sshll.u32 [#allocation2], 4
      %s18 = int_to_ptr.vmem [resolvable:$true] %s17
      %23 = dma.hbm_to_vmem [thread:$0]  %s1, 2048, %s18, [#allocation3], 256, 256, 16
    $region9: #{lstm_forward.1} parent=1 // pred_fallthru
      _
    // Predicated region
    $region10: #{lstm_forward.1} parent=1 // pred_check
      _
    $region11: #{lstm_forward.1} parent=1 // pred_check_branch
      %25 = sbr.rel (0) target = $region13
    $region12: #{lstm_forward.1} parent=1 // pred_region
      _
    $region13: #{lstm_forward.1} parent=1 // pred_fallthru
      _
    // Predicated region
    $region14: #{lstm_forward.1} parent=1 // pred_check
      _
    $region15: #{lstm_forward.1} parent=1 // pred_check_branch
      %27 = sbr.rel (0) target = $region17
    $region16: #{lstm_forward.1} parent=1 // pred_region
      _
    $region17: #{lstm_forward.1} parent=1 // pred_fallthru
      _
    // Predicated region
    $region18: #{lstm_forward.1} parent=1 // pred_check
      _
    $region19: #{lstm_forward.1} parent=1 // pred_check_branch
      %29 = sbr.rel (0) target = $region21
    $region20: #{lstm_forward.1} parent=1 // pred_region
      %30 = dma.done [#allocation3], 2048
    $region21: #{lstm_forward.1} parent=1 // pred_fallthru
      _
    %v31 = vld [vmem:[#allocation2] sm:$0xff]
    %v32 = vld [vmem:[#allocation2 + $0x8] sm:$0xff]
    %v33 = vld [vmem:[#allocation2 + $0x10] sm:$0xff]
    %v34 = vld [vmem:[#allocation2 + $0x18] sm:$0xff]
    %v35 = vld [vmem:[#allocation2 + $0x20] sm:$0xff]
    %v36 = vld [vmem:[#allocation2 + $0x28] sm:$0xff]
    %v37 = vld [vmem:[#allocation2 + $0x30] sm:$0xff]
    %v38 = vld [vmem:[#allocation2 + $0x38] sm:$0xff]
    %v39 = vld [vmem:[#allocation2 + $0x40] sm:$0xff]
    %v40 = vld [vmem:[#allocation2 + $0x48] sm:$0xff]
    %v41 = vld [vmem:[#allocation2 + $0x50] sm:$0xff]
    %v42 = vld [vmem:[#allocation2 + $0x58] sm:$0xff]
    %v43 = vld [vmem:[#allocation2 + $0x60] sm:$0xff]
    %v44 = vld [vmem:[#allocation2 + $0x68] sm:$0xff]
    %v45 = vld [vmem:[#allocation2 + $0x70] sm:$0xff]
    %v46 = vld [vmem:[#allocation2 + $0x78] sm:$0xff]
    %v47 = vld [vmem:[%s2] sm:$0xff]
    %v48 = vld [vmem:[%s2 + $0x8] sm:$0xff]
    %v49 = vld [vmem:[%s2 + $0x10] sm:$0xff]
    %v50 = vld [vmem:[%s2 + $0x18] sm:$0xff]
    %v51 = vld [vmem:[%s2 + $0x20] sm:$0xff]
    %v52 = vld [vmem:[%s2 + $0x28] sm:$0xff]
    %v53 = vld [vmem:[%s2 + $0x30] sm:$0xff]
    %v54 = vld [vmem:[%s2 + $0x38] sm:$0xff]
    %v55 = vld [vmem:[%s2 + $0x40] sm:$0xff]
    %v56 = vld [vmem:[%s2 + $0x48] sm:$0xff]
    %v57 = vld [vmem:[%s2 + $0x50] sm:$0xff]
    %v58 = vld [vmem:[%s2 + $0x58] sm:$0xff]
    %v59 = vld [vmem:[%s2 + $0x60] sm:$0xff]
    %v60 = vld [vmem:[%s2 + $0x68] sm:$0xff]
    %v61 = vld [vmem:[%s2 + $0x70] sm:$0xff]
    %v62 = vld [vmem:[%s2 + $0x78] sm:$0xff]
    %v63 = vld [vmem:[%s2 + $0x80] sm:$0xff]
    %v64 = vld [vmem:[%s2 + $0x88] sm:$0xff]
    %v65 = vld [vmem:[%s2 + $0x90] sm:$0xff]
    %v66 = vld [vmem:[%s2 + $0x98] sm:$0xff]
    %v67 = vld [vmem:[%s2 + $0xa0] sm:$0xff]
    %v68 = vld [vmem:[%s2 + $0xa8] sm:$0xff]
    %v69 = vld [vmem:[%s2 + $0xb0] sm:$0xff]
    %v70 = vld [vmem:[%s2 + $0xb8] sm:$0xff]
    %v71 = vld [vmem:[%s2 + $0xc0] sm:$0xff]
    %v72 = vld [vmem:[%s2 + $0xc8] sm:$0xff]
    %v73 = vld [vmem:[%s2 + $0xd0] sm:$0xff]
    %v74 = vld [vmem:[%s2 + $0xd8] sm:$0xff]
    %v75 = vld [vmem:[%s2 + $0xe0] sm:$0xff]
    %v76 = vld [vmem:[%s2 + $0xe8] sm:$0xff]
    %v77 = vld [vmem:[%s2 + $0xf0] sm:$0xff]
    %v78 = vld [vmem:[%s2 + $0xf8] sm:$0xff]
    %v79 = vld [vmem:[%s3] sm:$0x3]
    %v80 = vld [vmem:[%s0] sm:$0xff]
    %v81 = vld [vmem:[%s0 + $0x8] sm:$0xff]
    %vm82 = vcmask 523264
    %v84 = vsel %vm82, 0.0, 0
    %86 = vmatprep.subr.mxu0 %v32
    %87 = vmatpush1.msra.mxu0 %v31
    %88 = vmatprep.subr.mxu0 %v34
    %89 = vmatpush1.msra.mxu0 %v33
    %90 = vmatprep.subr.mxu0 %v36
    %91 = vmatpush1.msra.mxu0 %v35
    %92 = vmatprep.subr.mxu0 %v38
    %93 = vmatpush1.msra.mxu0 %v37
    %94 = vmatprep.subr.mxu0 %v40
    %95 = vmatpush1.msra.mxu0 %v39
    %96 = vmatprep.subr.mxu0 %v42
    %97 = vmatpush1.msra.mxu0 %v41
    %98 = vmatprep.subr.mxu0 %v44
    %99 = vmatpush1.msra.mxu0 %v43
    %100 = vmatprep.subr.mxu0 %v46
    %101 = vmatpush1.msra.mxu0 %v45
    %102 = vmatprep.subr.mxu0 0.0
    %103 = vmatpush1.msra.mxu0 0.0
    %104 = vmatprep.subr.mxu0 0.0
    %105 = vmatpush1.msra.mxu0 0.0
    %106 = vmatprep.subr.mxu0 0.0
    %107 = vmatpush1.msra.mxu0 0.0
    %108 = vmatprep.subr.mxu0 0.0
    %109 = vmatpush1.msra.mxu0 0.0
    %110 = vmatprep.subr.mxu0 0.0
    %111 = vmatpush1.msra.mxu0 0.0
    %112 = vmatprep.subr.mxu0 0.0
    %113 = vmatpush1.msra.mxu0 0.0
    %114 = vmatprep.subr.mxu0 0.0
    %115 = vmatpush1.msra.mxu0 0.0
    %116 = vmatprep.subr.mxu0 0.0
    %117 = vmatpush1.msra.mxu0 0.0
    %118 = vmatprep.subr.mxu0 0.0
    %119 = vmatpush1.msra.mxu0 0.0
    %120 = vmatprep.subr.mxu0 0.0
    %121 = vmatpush1.msra.mxu0 0.0
    %122 = vmatprep.subr.mxu0 0.0
    %123 = vmatpush1.msra.mxu0 0.0
    %124 = vmatprep.subr.mxu0 0.0
    %125 = vmatpush1.msra.mxu0 0.0
    %126 = vmatprep.subr.mxu0 0.0
    %127 = vmatpush1.msra.mxu0 0.0
    %128 = vmatprep.subr.mxu0 0.0
    %129 = vmatpush1.msra.mxu0 0.0
    %130 = vmatprep.subr.mxu0 0.0
    %131 = vmatpush1.msra.mxu0 0.0
    %132 = vmatprep.subr.mxu0 0.0
    %133 = vmatpush1.msra.mxu0 0.0
    %134 = vmatprep.subr.mxu0 0.0
    %135 = vmatpush1.msra.mxu0 0.0
    %136 = vmatprep.subr.mxu0 0.0
    %137 = vmatpush1.msra.mxu0 0.0
    %138 = vmatprep.subr.mxu0 0.0
    %139 = vmatpush1.msra.mxu0 0.0
    %140 = vmatprep.subr.mxu0 0.0
    %141 = vmatpush1.msra.mxu0 0.0
    %142 = vmatprep.subr.mxu0 0.0
    %143 = vmatpush1.msra.mxu0 0.0
    %144 = vmatprep.subr.mxu0 0.0
    %145 = vmatpush1.msra.mxu0 0.0
    %146 = vmatprep.subr.mxu0 0.0
    %147 = vmatpush1.msra.mxu0 0.0
    %148 = vmatprep.subr.mxu0 0.0
    %149 = vmatpush1.msra.mxu0 0.0
    %150 = vmatprep.mubr.f32.mxu0 0.0
    %151 = vmatmul.mubr.f32.gmra.mrb[0].mxu0 %v84
    %v152 = vpop.f32.mrb[0].mxu0
    %v153 = vadd.f32 0.0, %v152
    %v154 = vpop.f32.mrb[0].mxu0
    %v155 = vadd.f32 0.0, %v154
    %156 = vdwg.mxu0
    %v157 = vadd.f32 %v80, %v153
    %v158 = vadd.f32 %v81, %v155
    %v159 = vmul.f32 %v157, 0.5
    %v160 = vmul.f32 %v158, 0.5
    %v161 = vtanh.pop %v159
    %v162 = vtanh.pop %v160
    %v163 = vmul.f32 %v161, 0.5
    %v164 = vmul.f32 %v162, 0.5
    %v165 = vadd.f32 %v163, 0.5
    %v166 = vadd.f32 %v164, 0.5
    %v167 = vtanh.pop %v158
    %v168 = vmul.f32 %v165, 0.0
    %v169 = vmul.f32 %v165, %v167
    %171 = vrot.lane.b32.xlu0 %v169, 64
    %v172 = vpop.permute.xlu0 %171
    %v174 = vadd.f32 %v168, %v172
    %v175 = vtanh.pop %v174
    %v176 = vmul.f32 %v166, %v175
    %178 = vrot.lane.b32.xlu0 %v176, 64
    %v179 = vpop.permute.xlu0 %178
    %v181 = vsel %vm82, %v179, 0.0
    %v183 = vlaneseq
    %v184 = vshrl.u32 %v183, 7
    %v185 = vsub.s32 0, %v184
    %v186 = vrot.slane %v79, %v185
    %v187 = vlaneseq
    %v188 = vshrl.u32 %v187, 7
    %v189 = vsub.s32 1, %v188
    %v190 = vrot.slane %v79, %v189
    %193 = vmatprep.subr.mxu0 %v48
    %194 = vmatpush1.msra.mxu0 %v47
    %195 = vmatprep.subr.mxu0 %v50
    %196 = vmatpush1.msra.mxu0 %v49
    %197 = vmatprep.subr.mxu0 %v52
    %198 = vmatpush1.msra.mxu0 %v51
    %199 = vmatprep.subr.mxu0 %v54
    %200 = vmatpush1.msra.mxu0 %v53
    %201 = vmatprep.subr.mxu0 %v56
    %202 = vmatpush1.msra.mxu0 %v55
    %203 = vmatprep.subr.mxu0 %v58
    %204 = vmatpush1.msra.mxu0 %v57
    %205 = vmatprep.subr.mxu0 %v60
    %206 = vmatpush1.msra.mxu0 %v59
    %207 = vmatprep.subr.mxu0 %v62
    %208 = vmatpush1.msra.mxu0 %v61
    %209 = vmatprep.subr.mxu0 %v64
    %210 = vmatpush1.msra.mxu0 %v63
    %211 = vmatprep.subr.mxu0 %v66
    %212 = vmatpush1.msra.mxu0 %v65
    %213 = vmatprep.subr.mxu0 %v68
    %214 = vmatpush1.msra.mxu0 %v67
    %215 = vmatprep.subr.mxu0 %v70
    %216 = vmatpush1.msra.mxu0 %v69
    %217 = vmatprep.subr.mxu0 %v72
    %218 = vmatpush1.msra.mxu0 %v71
    %219 = vmatprep.subr.mxu0 %v74
    %220 = vmatpush1.msra.mxu0 %v73
    %221 = vmatprep.subr.mxu0 %v76
    %222 = vmatpush1.msra.mxu0 %v75
    %223 = vmatprep.subr.mxu0 %v78
    %224 = vmatpush1.msra.mxu0 %v77
    %225 = vmatprep.subr.mxu0 0.0
    %226 = vmatpush1.msra.mxu0 0.0
    %227 = vmatprep.subr.mxu0 0.0
    %228 = vmatpush1.msra.mxu0 0.0
    %229 = vmatprep.subr.mxu0 0.0
    %230 = vmatpush1.msra.mxu0 0.0
    %231 = vmatprep.subr.mxu0 0.0
    %232 = vmatpush1.msra.mxu0 0.0
    %233 = vmatprep.subr.mxu0 0.0
    %234 = vmatpush1.msra.mxu0 0.0
    %235 = vmatprep.subr.mxu0 0.0
    %236 = vmatpush1.msra.mxu0 0.0
    %237 = vmatprep.subr.mxu0 0.0
    %238 = vmatpush1.msra.mxu0 0.0
    %239 = vmatprep.subr.mxu0 0.0
    %240 = vmatpush1.msra.mxu0 0.0
    %241 = vmatprep.subr.mxu0 0.0
    %242 = vmatpush1.msra.mxu0 0.0
    %243 = vmatprep.subr.mxu0 0.0
    %244 = vmatpush1.msra.mxu0 0.0
    %245 = vmatprep.subr.mxu0 0.0
    %246 = vmatpush1.msra.mxu0 0.0
    %247 = vmatprep.subr.mxu0 0.0
    %248 = vmatpush1.msra.mxu0 0.0
    %249 = vmatprep.subr.mxu0 0.0
    %250 = vmatpush1.msra.mxu0 0.0
    %251 = vmatprep.subr.mxu0 0.0
    %252 = vmatpush1.msra.mxu0 0.0
    %253 = vmatprep.subr.mxu0 0.0
    %254 = vmatpush1.msra.mxu0 0.0
    %255 = vmatprep.subr.mxu0 0.0
    %256 = vmatpush1.msra.mxu0 0.0
    %257 = vmatprep.mubr.f32.mxu0 0.0
    %258 = vmatmul.mubr.f32.gmra.mrb[0].mxu0 %v181
    %v259 = vpop.f32.mrb[0].mxu0
    %v260 = vadd.f32 %v186, %v259
    %v261 = vpop.f32.mrb[0].mxu0
    %v262 = vadd.f32 %v190, %v261
    %263 = vdwg.mxu0
    %v264 = vmul.f32 %v260, 0.5
    %v265 = vmul.f32 %v262, 0.5
    %v266 = vtanh.pop %v264
    %v267 = vtanh.pop %v265
    %v268 = vmul.f32 %v266, 0.5
    %v269 = vmul.f32 %v267, 0.5
    %v270 = vadd.f32 %v268, 0.5
    %v271 = vadd.f32 %v269, 0.5
    %v272 = vtanh.pop %v262
    %v273 = vmul.f32 %v270, 0.0
    %v274 = vmul.f32 %v270, %v272
    %276 = vrot.lane.b32.xlu0 %v274, 64
    %v277 = vpop.permute.xlu0 %276
    %v279 = vadd.f32 %v273, %v277
    %v280 = vtanh.pop %v279
    %v281 = vmul.f32 %v271, %v280
    %s282 = scalar_lea.vmem %s0, 16
    %v283 = vld [vmem:[%s282] sm:$0xff]
    %v284 = vld [vmem:[%s282 + $0x8] sm:$0xff]
    %v285 = vsel %vm82, %v179, 0
    %287 = vmatprep.subr.mxu0 %v32
    %288 = vmatpush1.msra.mxu0 %v31
    %289 = vmatprep.subr.mxu0 %v34
    %290 = vmatpush1.msra.mxu0 %v33
    %291 = vmatprep.subr.mxu0 %v36
    %292 = vmatpush1.msra.mxu0 %v35
    %293 = vmatprep.subr.mxu0 %v38
    %294 = vmatpush1.msra.mxu0 %v37
    %295 = vmatprep.subr.mxu0 %v40
    %296 = vmatpush1.msra.mxu0 %v39
    %297 = vmatprep.subr.mxu0 %v42
    %298 = vmatpush1.msra.mxu0 %v41
    %299 = vmatprep.subr.mxu0 %v44
    %300 = vmatpush1.msra.mxu0 %v43
    %301 = vmatprep.subr.mxu0 %v46
    %302 = vmatpush1.msra.mxu0 %v45
    %303 = vmatprep.subr.mxu0 0.0
    %304 = vmatpush1.msra.mxu0 0.0
    %305 = vmatprep.subr.mxu0 0.0
    %306 = vmatpush1.msra.mxu0 0.0
    %307 = vmatprep.subr.mxu0 0.0
    %308 = vmatpush1.msra.mxu0 0.0
    %309 = vmatprep.subr.mxu0 0.0
    %310 = vmatpush1.msra.mxu0 0.0
    %311 = vmatprep.subr.mxu0 0.0
    %312 = vmatpush1.msra.mxu0 0.0
    %313 = vmatprep.subr.mxu0 0.0
    %314 = vmatpush1.msra.mxu0 0.0
    %315 = vmatprep.subr.mxu0 0.0
    %316 = vmatpush1.msra.mxu0 0.0
    %317 = vmatprep.subr.mxu0 0.0
    %318 = vmatpush1.msra.mxu0 0.0
    %319 = vmatprep.subr.mxu0 0.0
    %320 = vmatpush1.msra.mxu0 0.0
    %321 = vmatprep.subr.mxu0 0.0
    %322 = vmatpush1.msra.mxu0 0.0
    %323 = vmatprep.subr.mxu0 0.0
    %324 = vmatpush1.msra.mxu0 0.0
    %325 = vmatprep.subr.mxu0 0.0
    %326 = vmatpush1.msra.mxu0 0.0
    %327 = vmatprep.subr.mxu0 0.0
    %328 = vmatpush1.msra.mxu0 0.0
    %329 = vmatprep.subr.mxu0 0.0
    %330 = vmatpush1.msra.mxu0 0.0
    %331 = vmatprep.subr.mxu0 0.0
    %332 = vmatpush1.msra.mxu0 0.0
    %333 = vmatprep.subr.mxu0 0.0
    %334 = vmatpush1.msra.mxu0 0.0
    %335 = vmatprep.subr.mxu0 0.0
    %336 = vmatpush1.msra.mxu0 0.0
    %337 = vmatprep.subr.mxu0 0.0
    %338 = vmatpush1.msra.mxu0 0.0
    %339 = vmatprep.subr.mxu0 0.0
    %340 = vmatpush1.msra.mxu0 0.0
    %341 = vmatprep.subr.mxu0 0.0
    %342 = vmatpush1.msra.mxu0 0.0
    %343 = vmatprep.subr.mxu0 0.0
    %344 = vmatpush1.msra.mxu0 0.0
    %345 = vmatprep.subr.mxu0 0.0
    %346 = vmatpush1.msra.mxu0 0.0
    %347 = vmatprep.subr.mxu0 0.0
    %348 = vmatpush1.msra.mxu0 0.0
    %349 = vmatprep.subr.mxu0 0.0
    %350 = vmatpush1.msra.mxu0 0.0
    %351 = vmatprep.mubr.f32.mxu0 0.0
    %352 = vmatmul.mubr.f32.gmra.mrb[0].mxu0 %v285
    %v353 = vpop.f32.mrb[0].mxu0
    %v354 = vadd.f32 0.0, %v353
    %v355 = vpop.f32.mrb[0].mxu0
    %v356 = vadd.f32 0.0, %v355
    %357 = vdwg.mxu0
    %v358 = vadd.f32 %v283, %v354
    %v359 = vadd.f32 %v284, %v356
    %v360 = vmul.f32 %v358, 0.5
    %v361 = vmul.f32 %v359, 0.5
    %v362 = vtanh.pop %v360
    %v363 = vtanh.pop %v361
    %v364 = vmul.f32 %v362, 0.5
    %v365 = vmul.f32 %v363, 0.5
    %v366 = vadd.f32 %v364, 0.5
    %v367 = vadd.f32 %v365, 0.5
    %v368 = vtanh.pop %v359
    %v369 = vmul.f32 %v366, %v174
    %v370 = vmul.f32 %v366, %v368
    %372 = vrot.lane.b32.xlu0 %v370, 64
    %v373 = vpop.permute.xlu0 %372
    %v375 = vadd.f32 %v369, %v373
    %v376 = vtanh.pop %v375
    %v377 = vmul.f32 %v367, %v376
    %379 = vrot.lane.b32.xlu0 %v377, 64
    %v380 = vpop.permute.xlu0 %379
    %v382 = vsel %vm82, %v380, %v281
    %383 = vmatprep.subr.mxu0 %v48
    %384 = vmatpush1.msra.mxu0 %v47
    %385 = vmatprep.subr.mxu0 %v50
    %386 = vmatpush1.msra.mxu0 %v49
    %387 = vmatprep.subr.mxu0 %v52
    %388 = vmatpush1.msra.mxu0 %v51
    %389 = vmatprep.subr.mxu0 %v54
    %390 = vmatpush1.msra.mxu0 %v53
    %391 = vmatprep.subr.mxu0 %v56
    %392 = vmatpush1.msra.mxu0 %v55
    %393 = vmatprep.subr.mxu0 %v58
    %394 = vmatpush1.msra.mxu0 %v57
    %395 = vmatprep.subr.mxu0 %v60
    %396 = vmatpush1.msra.mxu0 %v59
    %397 = vmatprep.subr.mxu0 %v62
    %398 = vmatpush1.msra.mxu0 %v61
    %399 = vmatprep.subr.mxu0 %v64
    %400 = vmatpush1.msra.mxu0 %v63
    %401 = vmatprep.subr.mxu0 %v66
    %402 = vmatpush1.msra.mxu0 %v65
    %403 = vmatprep.subr.mxu0 %v68
    %404 = vmatpush1.msra.mxu0 %v67
    %405 = vmatprep.subr.mxu0 %v70
    %406 = vmatpush1.msra.mxu0 %v69
    %407 = vmatprep.subr.mxu0 %v72
    %408 = vmatpush1.msra.mxu0 %v71
    %409 = vmatprep.subr.mxu0 %v74
    %410 = vmatpush1.msra.mxu0 %v73
    %411 = vmatprep.subr.mxu0 %v76
    %412 = vmatpush1.msra.mxu0 %v75
    %413 = vmatprep.subr.mxu0 %v78
    %414 = vmatpush1.msra.mxu0 %v77
    %415 = vmatprep.subr.mxu0 0.0
    %416 = vmatpush1.msra.mxu0 0.0
    %417 = vmatprep.subr.mxu0 0.0
    %418 = vmatpush1.msra.mxu0 0.0
    %419 = vmatprep.subr.mxu0 0.0
    %420 = vmatpush1.msra.mxu0 0.0
    %421 = vmatprep.subr.mxu0 0.0
    %422 = vmatpush1.msra.mxu0 0.0
    %423 = vmatprep.subr.mxu0 0.0
    %424 = vmatpush1.msra.mxu0 0.0
    %425 = vmatprep.subr.mxu0 0.0
    %426 = vmatpush1.msra.mxu0 0.0
    %427 = vmatprep.subr.mxu0 0.0
    %428 = vmatpush1.msra.mxu0 0.0
    %429 = vmatprep.subr.mxu0 0.0
    %430 = vmatpush1.msra.mxu0 0.0
    %431 = vmatprep.subr.mxu0 0.0
    %432 = vmatpush1.msra.mxu0 0.0
    %433 = vmatprep.subr.mxu0 0.0
    %434 = vmatpush1.msra.mxu0 0.0
    %435 = vmatprep.subr.mxu0 0.0
    %436 = vmatpush1.msra.mxu0 0.0
    %437 = vmatprep.subr.mxu0 0.0
    %438 = vmatpush1.msra.mxu0 0.0
    %439 = vmatprep.subr.mxu0 0.0
    %440 = vmatpush1.msra.mxu0 0.0
    %441 = vmatprep.subr.mxu0 0.0
    %442 = vmatpush1.msra.mxu0 0.0
    %443 = vmatprep.subr.mxu0 0.0
    %444 = vmatpush1.msra.mxu0 0.0
    %445 = vmatprep.subr.mxu0 0.0
    %446 = vmatpush1.msra.mxu0 0.0
    %447 = vmatprep.mubr.f32.mxu0 0.0
    %448 = vmatmul.mubr.f32.gmra.mrb[0].mxu0 %v382
    %v449 = vpop.f32.mrb[0].mxu0
    %v450 = vadd.f32 %v186, %v449
    %v451 = vpop.f32.mrb[0].mxu0
    %v452 = vadd.f32 %v190, %v451
    %453 = vdwg.mxu0
    %v454 = vmul.f32 %v450, 0.5
    %v455 = vmul.f32 %v452, 0.5
    %v456 = vtanh.pop %v454
    %v457 = vtanh.pop %v455
    %v458 = vmul.f32 %v456, 0.5
    %v459 = vmul.f32 %v457, 0.5
    %v460 = vadd.f32 %v458, 0.5
    %v461 = vadd.f32 %v459, 0.5
    %v462 = vtanh.pop %v452
    %v463 = vmul.f32 %v460, %v279
    %v464 = vmul.f32 %v460, %v462
    %466 = vrot.lane.b32.xlu0 %v464, 64
    %v467 = vpop.permute.xlu0 %466
    %v469 = vadd.f32 %v463, %v467
    %v470 = vtanh.pop %v469
    %v471 = vmul.f32 %v461, %v470
    %s472 = scalar_lea.vmem %s0, 32
    %v473 = vld [vmem:[%s472] sm:$0xff]
    %v474 = vld [vmem:[%s472 + $0x8] sm:$0xff]
    %v475 = vsel %vm82, %v380, 0
    %477 = vmatprep.subr.mxu0 %v32
    %478 = vmatpush1.msra.mxu0 %v31
    %479 = vmatprep.subr.mxu0 %v34
    %480 = vmatpush1.msra.mxu0 %v33
    %481 = vmatprep.subr.mxu0 %v36
    %482 = vmatpush1.msra.mxu0 %v35
    %483 = vmatprep.subr.mxu0 %v38
    %484 = vmatpush1.msra.mxu0 %v37
    %485 = vmatprep.subr.mxu0 %v40
    %486 = vmatpush1.msra.mxu0 %v39
    %487 = vmatprep.subr.mxu0 %v42
    %488 = vmatpush1.msra.mxu0 %v41
    %489 = vmatprep.subr.mxu0 %v44
    %490 = vmatpush1.msra.mxu0 %v43
    %491 = vmatprep.subr.mxu0 %v46
    %492 = vmatpush1.msra.mxu0 %v45
    %493 = vmatprep.subr.mxu0 0.0
    %494 = vmatpush1.msra.mxu0 0.0
    %495 = vmatprep.subr.mxu0 0.0
    %496 = vmatpush1.msra.mxu0 0.0
    %497 = vmatprep.subr.mxu0 0.0
    %498 = vmatpush1.msra.mxu0 0.0
    %499 = vmatprep.subr.mxu0 0.0
    %500 = vmatpush1.msra.mxu0 0.0
    %501 = vmatprep.subr.mxu0 0.0
    %502 = vmatpush1.msra.mxu0 0.0
    %503 = vmatprep.subr.mxu0 0.0
    %504 = vmatpush1.msra.mxu0 0.0
    %505 = vmatprep.subr.mxu0 0.0
    %506 = vmatpush1.msra.mxu0 0.0
    %507 = vmatprep.subr.mxu0 0.0
    %508 = vmatpush1.msra.mxu0 0.0
    %509 = vmatprep.subr.mxu0 0.0
    %510 = vmatpush1.msra.mxu0 0.0
    %511 = vmatprep.subr.mxu0 0.0
    %512 = vmatpush1.msra.mxu0 0.0
    %513 = vmatprep.subr.mxu0 0.0
    %514 = vmatpush1.msra.mxu0 0.0
    %515 = vmatprep.subr.mxu0 0.0
    %516 = vmatpush1.msra.mxu0 0.0
    %517 = vmatprep.subr.mxu0 0.0
    %518 = vmatpush1.msra.mxu0 0.0
    %519 = vmatprep.subr.mxu0 0.0
    %520 = vmatpush1.msra.mxu0 0.0
    %521 = vmatprep.subr.mxu0 0.0
    %522 = vmatpush1.msra.mxu0 0.0
    %523 = vmatprep.subr.mxu0 0.0
    %524 = vmatpush1.msra.mxu0 0.0
    %525 = vmatprep.subr.mxu0 0.0
    %526 = vmatpush1.msra.mxu0 0.0
    %527 = vmatprep.subr.mxu0 0.0
    %528 = vmatpush1.msra.mxu0 0.0
    %529 = vmatprep.subr.mxu0 0.0
    %530 = vmatpush1.msra.mxu0 0.0
    %531 = vmatprep.subr.mxu0 0.0
    %532 = vmatpush1.msra.mxu0 0.0
    %533 = vmatprep.subr.mxu0 0.0
    %534 = vmatpush1.msra.mxu0 0.0
    %535 = vmatprep.subr.mxu0 0.0
    %536 = vmatpush1.msra.mxu0 0.0
    %537 = vmatprep.subr.mxu0 0.0
    %538 = vmatpush1.msra.mxu0 0.0
    %539 = vmatprep.subr.mxu0 0.0
    %540 = vmatpush1.msra.mxu0 0.0
    %541 = vmatprep.mubr.f32.mxu0 0.0
    %542 = vmatmul.mubr.f32.gmra.mrb[0].mxu0 %v475
    %v543 = vpop.f32.mrb[0].mxu0
    %v544 = vadd.f32 0.0, %v543
    %v545 = vpop.f32.mrb[0].mxu0
    %v546 = vadd.f32 0.0, %v545
    %547 = vdwg.mxu0
    %v548 = vadd.f32 %v473, %v544
    %v549 = vadd.f32 %v474, %v546
    %v550 = vmul.f32 %v548, 0.5
    %v551 = vmul.f32 %v549, 0.5
    %v552 = vtanh.pop %v550
    %v553 = vtanh.pop %v551
    %v554 = vmul.f32 %v552, 0.5
    %v555 = vmul.f32 %v553, 0.5
    %v556 = vadd.f32 %v554, 0.5
    %v557 = vadd.f32 %v555, 0.5
    %v558 = vtanh.pop %v549
    %v559 = vmul.f32 %v556, %v375
    %v560 = vmul.f32 %v556, %v558
    %562 = vrot.lane.b32.xlu0 %v560, 64
    %v563 = vpop.permute.xlu0 %562
    %v565 = vadd.f32 %v559, %v563
    %v566 = vtanh.pop %v565
    %v567 = vmul.f32 %v557, %v566
    %569 = vrot.lane.b32.xlu0 %v567, 64
    %v570 = vpop.permute.xlu0 %569
    %v572 = vsel %vm82, %v570, %v471
    %573 = vmatprep.subr.mxu0 %v48
    %574 = vmatpush1.msra.mxu0 %v47
    %575 = vmatprep.subr.mxu0 %v50
    %576 = vmatpush1.msra.mxu0 %v49
    %577 = vmatprep.subr.mxu0 %v52
    %578 = vmatpush1.msra.mxu0 %v51
    %579 = vmatprep.subr.mxu0 %v54
    %580 = vmatpush1.msra.mxu0 %v53
    %581 = vmatprep.subr.mxu0 %v56
    %582 = vmatpush1.msra.mxu0 %v55
    %583 = vmatprep.subr.mxu0 %v58
    %584 = vmatpush1.msra.mxu0 %v57
    %585 = vmatprep.subr.mxu0 %v60
    %586 = vmatpush1.msra.mxu0 %v59
    %587 = vmatprep.subr.mxu0 %v62
    %588 = vmatpush1.msra.mxu0 %v61
    %589 = vmatprep.subr.mxu0 %v64
    %590 = vmatpush1.msra.mxu0 %v63
    %591 = vmatprep.subr.mxu0 %v66
    %592 = vmatpush1.msra.mxu0 %v65
    %593 = vmatprep.subr.mxu0 %v68
    %594 = vmatpush1.msra.mxu0 %v67
    %595 = vmatprep.subr.mxu0 %v70
    %596 = vmatpush1.msra.mxu0 %v69
    %597 = vmatprep.subr.mxu0 %v72
    %598 = vmatpush1.msra.mxu0 %v71
    %599 = vmatprep.subr.mxu0 %v74
    %600 = vmatpush1.msra.mxu0 %v73
    %601 = vmatprep.subr.mxu0 %v76
    %602 = vmatpush1.msra.mxu0 %v75
    %603 = vmatprep.subr.mxu0 %v78
    %604 = vmatpush1.msra.mxu0 %v77
    %605 = vmatprep.subr.mxu0 0.0
    %606 = vmatpush1.msra.mxu0 0.0
    %607 = vmatprep.subr.mxu0 0.0
    %608 = vmatpush1.msra.mxu0 0.0
    %609 = vmatprep.subr.mxu0 0.0
    %610 = vmatpush1.msra.mxu0 0.0
    %611 = vmatprep.subr.mxu0 0.0
    %612 = vmatpush1.msra.mxu0 0.0
    %613 = vmatprep.subr.mxu0 0.0
    %614 = vmatpush1.msra.mxu0 0.0
    %615 = vmatprep.subr.mxu0 0.0
    %616 = vmatpush1.msra.mxu0 0.0
    %617 = vmatprep.subr.mxu0 0.0
    %618 = vmatpush1.msra.mxu0 0.0
    %619 = vmatprep.subr.mxu0 0.0
    %620 = vmatpush1.msra.mxu0 0.0
    %621 = vmatprep.subr.mxu0 0.0
    %622 = vmatpush1.msra.mxu0 0.0
    %623 = vmatprep.subr.mxu0 0.0
    %624 = vmatpush1.msra.mxu0 0.0
    %625 = vmatprep.subr.mxu0 0.0
    %626 = vmatpush1.msra.mxu0 0.0
    %627 = vmatprep.subr.mxu0 0.0
    %628 = vmatpush1.msra.mxu0 0.0
    %629 = vmatprep.subr.mxu0 0.0
    %630 = vmatpush1.msra.mxu0 0.0
    %631 = vmatprep.subr.mxu0 0.0
    %632 = vmatpush1.msra.mxu0 0.0
    %633 = vmatprep.subr.mxu0 0.0
    %634 = vmatpush1.msra.mxu0 0.0
    %635 = vmatprep.subr.mxu0 0.0
    %636 = vmatpush1.msra.mxu0 0.0
    %637 = vmatprep.mubr.f32.mxu0 0.0
    %638 = vmatmul.mubr.f32.gmra.mrb[0].mxu0 %v572
    %v639 = vpop.f32.mrb[0].mxu0
    %v640 = vadd.f32 %v186, %v639
    %v641 = vpop.f32.mrb[0].mxu0
    %v642 = vadd.f32 %v190, %v641
    %643 = vdwg.mxu0
    %v644 = vmul.f32 %v640, 0.5
    %v645 = vmul.f32 %v642, 0.5
    %v646 = vtanh.pop %v644
    %v647 = vtanh.pop %v645
    %v648 = vmul.f32 %v646, 0.5
    %v649 = vmul.f32 %v647, 0.5
    %v650 = vadd.f32 %v648, 0.5
    %v651 = vadd.f32 %v649, 0.5
    %v652 = vtanh.pop %v642
    %v653 = vmul.f32 %v650, %v469
    %v654 = vmul.f32 %v650, %v652
    %656 = vrot.lane.b32.xlu0 %v654, 64
    %v657 = vpop.permute.xlu0 %656
    %v659 = vadd.f32 %v653, %v657
    %v660 = vtanh.pop %v659
    %v661 = vmul.f32 %v651, %v660
    %s662 = scalar_lea.vmem %s0, 48
    %v663 = vld [vmem:[%s662] sm:$0xff]
    %v664 = vld [vmem:[%s662 + $0x8] sm:$0xff]
    %v665 = vsel %vm82, %v570, 0
    %667 = vmatprep.subr.mxu0 %v32
    %668 = vmatpush1.msra.mxu0 %v31
    %669 = vmatprep.subr.mxu0 %v34
    %670 = vmatpush1.msra.mxu0 %v33
    %671 = vmatprep.subr.mxu0 %v36
    %672 = vmatpush1.msra.mxu0 %v35
    %673 = vmatprep.subr.mxu0 %v38
    %674 = vmatpush1.msra.mxu0 %v37
    %675 = vmatprep.subr.mxu0 %v40
    %676 = vmatpush1.msra.mxu0 %v39
    %677 = vmatprep.subr.mxu0 %v42
    %678 = vmatpush1.msra.mxu0 %v41
    %679 = vmatprep.subr.mxu0 %v44
    %680 = vmatpush1.msra.mxu0 %v43
    %681 = vmatprep.subr.mxu0 %v46
    %682 = vmatpush1.msra.mxu0 %v45
    %683 = vmatprep.subr.mxu0 0.0
    %684 = vmatpush1.msra.mxu0 0.0
    %685 = vmatprep.subr.mxu0 0.0
    %686 = vmatpush1.msra.mxu0 0.0
    %687 = vmatprep.subr.mxu0 0.0
    %688 = vmatpush1.msra.mxu0 0.0
    %689 = vmatprep.subr.mxu0 0.0
    %690 = vmatpush1.msra.mxu0 0.0
    %691 = vmatprep.subr.mxu0 0.0
    %692 = vmatpush1.msra.mxu0 0.0
    %693 = vmatprep.subr.mxu0 0.0
    %694 = vmatpush1.msra.mxu0 0.0
    %695 = vmatprep.subr.mxu0 0.0
    %696 = vmatpush1.msra.mxu0 0.0
    %697 = vmatprep.subr.mxu0 0.0
    %698 = vmatpush1.msra.mxu0 0.0
    %699 = vmatprep.subr.mxu0 0.0
    %700 = vmatpush1.msra.mxu0 0.0
    %701 = vmatprep.subr.mxu0 0.0
    %702 = vmatpush1.msra.mxu0 0.0
    %703 = vmatprep.subr.mxu0 0.0
    %704 = vmatpush1.msra.mxu0 0.0
    %705 = vmatprep.subr.mxu0 0.0
    %706 = vmatpush1.msra.mxu0 0.0
    %707 = vmatprep.subr.mxu0 0.0
    %708 = vmatpush1.msra.mxu0 0.0
    %709 = vmatprep.subr.mxu0 0.0
    %710 = vmatpush1.msra.mxu0 0.0
    %711 = vmatprep.subr.mxu0 0.0
    %712 = vmatpush1.msra.mxu0 0.0
    %713 = vmatprep.subr.mxu0 0.0
    %714 = vmatpush1.msra.mxu0 0.0
    %715 = vmatprep.subr.mxu0 0.0
    %716 = vmatpush1.msra.mxu0 0.0
    %717 = vmatprep.subr.mxu0 0.0
    %718 = vmatpush1.msra.mxu0 0.0
    %719 = vmatprep.subr.mxu0 0.0
    %720 = vmatpush1.msra.mxu0 0.0
    %721 = vmatprep.subr.mxu0 0.0
    %722 = vmatpush1.msra.mxu0 0.0
    %723 = vmatprep.subr.mxu0 0.0
    %724 = vmatpush1.msra.mxu0 0.0
    %725 = vmatprep.subr.mxu0 0.0
    %726 = vmatpush1.msra.mxu0 0.0
    %727 = vmatprep.subr.mxu0 0.0
    %728 = vmatpush1.msra.mxu0 0.0
    %729 = vmatprep.subr.mxu0 0.0
    %730 = vmatpush1.msra.mxu0 0.0
    %731 = vmatprep.mubr.f32.mxu0 0.0
    %732 = vmatmul.mubr.f32.gmra.mrb[0].mxu0 %v665
    %v733 = vpop.f32.mrb[0].mxu0
    %v734 = vadd.f32 0.0, %v733
    %v735 = vpop.f32.mrb[0].mxu0
    %v736 = vadd.f32 0.0, %v735
    %737 = vdwg.mxu0
    %v738 = vadd.f32 %v663, %v734
    %v739 = vadd.f32 %v664, %v736
    %v740 = vmul.f32 %v738, 0.5
    %v741 = vmul.f32 %v739, 0.5
    %v742 = vtanh.pop %v740
    %v743 = vtanh.pop %v741
    %v744 = vmul.f32 %v742, 0.5
    %v745 = vmul.f32 %v743, 0.5
    %v746 = vadd.f32 %v744, 0.5
    %v747 = vadd.f32 %v745, 0.5
    %v748 = vtanh.pop %v739
    %v749 = vmul.f32 %v746, %v565
    %v750 = vmul.f32 %v746, %v748
    %752 = vrot.lane.b32.xlu0 %v750, 64
    %v753 = vpop.permute.xlu0 %752
    %v755 = vadd.f32 %v749, %v753
    %v756 = vtanh.pop %v755
    %v757 = vmul.f32 %v747, %v756
    %759 = vrot.lane.b32.xlu0 %v757, 64
    %v760 = vpop.permute.xlu0 %759
    %v762 = vsel %vm82, %v760, %v661
    %763 = vmatprep.subr.mxu0 %v48
    %764 = vmatpush1.msra.mxu0 %v47
    %765 = vmatprep.subr.mxu0 %v50
    %766 = vmatpush1.msra.mxu0 %v49
    %767 = vmatprep.subr.mxu0 %v52
    %768 = vmatpush1.msra.mxu0 %v51
    %769 = vmatprep.subr.mxu0 %v54
    %770 = vmatpush1.msra.mxu0 %v53
    %771 = vmatprep.subr.mxu0 %v56
    %772 = vmatpush1.msra.mxu0 %v55
    %773 = vmatprep.subr.mxu0 %v58
    %774 = vmatpush1.msra.mxu0 %v57
    %775 = vmatprep.subr.mxu0 %v60
    %776 = vmatpush1.msra.mxu0 %v59
    %777 = vmatprep.subr.mxu0 %v62
    %778 = vmatpush1.msra.mxu0 %v61
    %779 = vmatprep.subr.mxu0 %v64
    %780 = vmatpush1.msra.mxu0 %v63
    %781 = vmatprep.subr.mxu0 %v66
    %782 = vmatpush1.msra.mxu0 %v65
    %783 = vmatprep.subr.mxu0 %v68
    %784 = vmatpush1.msra.mxu0 %v67
    %785 = vmatprep.subr.mxu0 %v70
    %786 = vmatpush1.msra.mxu0 %v69
    %787 = vmatprep.subr.mxu0 %v72
    %788 = vmatpush1.msra.mxu0 %v71
    %789 = vmatprep.subr.mxu0 %v74
    %790 = vmatpush1.msra.mxu0 %v73
    %791 = vmatprep.subr.mxu0 %v76
    %792 = vmatpush1.msra.mxu0 %v75
    %793 = vmatprep.subr.mxu0 %v78
    %794 = vmatpush1.msra.mxu0 %v77
    %795 = vmatprep.subr.mxu0 0.0
    %796 = vmatpush1.msra.mxu0 0.0
    %797 = vmatprep.subr.mxu0 0.0
    %798 = vmatpush1.msra.mxu0 0.0
    %799 = vmatprep.subr.mxu0 0.0
    %800 = vmatpush1.msra.mxu0 0.0
    %801 = vmatprep.subr.mxu0 0.0
    %802 = vmatpush1.msra.mxu0 0.0
    %803 = vmatprep.subr.mxu0 0.0
    %804 = vmatpush1.msra.mxu0 0.0
    %805 = vmatprep.subr.mxu0 0.0
    %806 = vmatpush1.msra.mxu0 0.0
    %807 = vmatprep.subr.mxu0 0.0
    %808 = vmatpush1.msra.mxu0 0.0
    %809 = vmatprep.subr.mxu0 0.0
    %810 = vmatpush1.msra.mxu0 0.0
    %811 = vmatprep.subr.mxu0 0.0
    %812 = vmatpush1.msra.mxu0 0.0
    %813 = vmatprep.subr.mxu0 0.0
    %814 = vmatpush1.msra.mxu0 0.0
    %815 = vmatprep.subr.mxu0 0.0
    %816 = vmatpush1.msra.mxu0 0.0
    %817 = vmatprep.subr.mxu0 0.0
    %818 = vmatpush1.msra.mxu0 0.0
    %819 = vmatprep.subr.mxu0 0.0
    %820 = vmatpush1.msra.mxu0 0.0
    %821 = vmatprep.subr.mxu0 0.0
    %822 = vmatpush1.msra.mxu0 0.0
    %823 = vmatprep.subr.mxu0 0.0
    %824 = vmatpush1.msra.mxu0 0.0
    %825 = vmatprep.subr.mxu0 0.0
    %826 = vmatpush1.msra.mxu0 0.0
    %827 = vmatprep.mubr.f32.mxu0 0.0
    %828 = vmatmul.mubr.f32.gmra.mrb[0].mxu0 %v762
    %v829 = vpop.f32.mrb[0].mxu0
    %v830 = vadd.f32 %v186, %v829
    %v831 = vpop.f32.mrb[0].mxu0
    %v832 = vadd.f32 %v190, %v831
    %833 = vdwg.mxu0
    %v834 = vmul.f32 %v830, 0.5
    %v835 = vmul.f32 %v832, 0.5
    %v836 = vtanh.pop %v834
    %v837 = vtanh.pop %v835
    %v838 = vmul.f32 %v836, 0.5
    %v839 = vmul.f32 %v837, 0.5
    %v840 = vadd.f32 %v838, 0.5
    %v841 = vadd.f32 %v839, 0.5
    %v842 = vtanh.pop %v832
    %v843 = vmul.f32 %v840, %v659
    %v844 = vmul.f32 %v840, %v842
    %846 = vrot.lane.b32.xlu0 %v844, 64
    %v847 = vpop.permute.xlu0 %846
    %v849 = vadd.f32 %v843, %v847
    %v850 = vtanh.pop %v849
    %v851 = vmul.f32 %v841, %v850
    %s852 = scalar_lea.vmem %s0, 64
    %v853 = vld [vmem:[%s852] sm:$0xff]
    %v854 = vld [vmem:[%s852 + $0x8] sm:$0xff]
    %v855 = vsel %vm82, %v760, 0
    %857 = vmatprep.subr.mxu0 %v32
    %858 = vmatpush1.msra.mxu0 %v31
    %859 = vmatprep.subr.mxu0 %v34
    %860 = vmatpush1.msra.mxu0 %v33
    %861 = vmatprep.subr.mxu0 %v36
    %862 = vmatpush1.msra.mxu0 %v35
    %863 = vmatprep.subr.mxu0 %v38
    %864 = vmatpush1.msra.mxu0 %v37
    %865 = vmatprep.subr.mxu0 %v40
    %866 = vmatpush1.msra.mxu0 %v39
    %867 = vmatprep.subr.mxu0 %v42
    %868 = vmatpush1.msra.mxu0 %v41
    %869 = vmatprep.subr.mxu0 %v44
    %870 = vmatpush1.msra.mxu0 %v43
    %871 = vmatprep.subr.mxu0 %v46
    %872 = vmatpush1.msra.mxu0 %v45
    %873 = vmatprep.subr.mxu0 0.0
    %874 = vmatpush1.msra.mxu0 0.0
    %875 = vmatprep.subr.mxu0 0.0
    %876 = vmatpush1.msra.mxu0 0.0
    %877 = vmatprep.subr.mxu0 0.0
    %878 = vmatpush1.msra.mxu0 0.0
    %879 = vmatprep.subr.mxu0 0.0
    %880 = vmatpush1.msra.mxu0 0.0
    %881 = vmatprep.subr.mxu0 0.0
    %882 = vmatpush1.msra.mxu0 0.0
    %883 = vmatprep.subr.mxu0 0.0
    %884 = vmatpush1.msra.mxu0 0.0
    %885 = vmatprep.subr.mxu0 0.0
    %886 = vmatpush1.msra.mxu0 0.0
    %887 = vmatprep.subr.mxu0 0.0
    %888 = vmatpush1.msra.mxu0 0.0
    %889 = vmatprep.subr.mxu0 0.0
    %890 = vmatpush1.msra.mxu0 0.0
    %891 = vmatprep.subr.mxu0 0.0
    %892 = vmatpush1.msra.mxu0 0.0
    %893 = vmatprep.subr.mxu0 0.0
    %894 = vmatpush1.msra.mxu0 0.0
    %895 = vmatprep.subr.mxu0 0.0
    %896 = vmatpush1.msra.mxu0 0.0
    %897 = vmatprep.subr.mxu0 0.0
    %898 = vmatpush1.msra.mxu0 0.0
    %899 = vmatprep.subr.mxu0 0.0
    %900 = vmatpush1.msra.mxu0 0.0
    %901 = vmatprep.subr.mxu0 0.0
    %902 = vmatpush1.msra.mxu0 0.0
    %903 = vmatprep.subr.mxu0 0.0
    %904 = vmatpush1.msra.mxu0 0.0
    %905 = vmatprep.subr.mxu0 0.0
    %906 = vmatpush1.msra.mxu0 0.0
    %907 = vmatprep.subr.mxu0 0.0
    %908 = vmatpush1.msra.mxu0 0.0
    %909 = vmatprep.subr.mxu0 0.0
    %910 = vmatpush1.msra.mxu0 0.0
    %911 = vmatprep.subr.mxu0 0.0
    %912 = vmatpush1.msra.mxu0 0.0
    %913 = vmatprep.subr.mxu0 0.0
    %914 = vmatpush1.msra.mxu0 0.0
    %915 = vmatprep.subr.mxu0 0.0
    %916 = vmatpush1.msra.mxu0 0.0
    %917 = vmatprep.subr.mxu0 0.0
    %918 = vmatpush1.msra.mxu0 0.0
    %919 = vmatprep.subr.mxu0 0.0
    %920 = vmatpush1.msra.mxu0 0.0
    %921 = vmatprep.mubr.f32.mxu0 0.0
    %922 = vmatmul.mubr.f32.gmra.mrb[0].mxu0 %v855
    %v923 = vpop.f32.mrb[0].mxu0
    %v924 = vadd.f32 0.0, %v923
    %v925 = vpop.f32.mrb[0].mxu0
    %v926 = vadd.f32 0.0, %v925
    %927 = vdwg.mxu0
    %v928 = vadd.f32 %v853, %v924
    %v929 = vadd.f32 %v854, %v926
    %v930 = vmul.f32 %v928, 0.5
    %v931 = vmul.f32 %v929, 0.5
    %v932 = vtanh.pop %v930
    %v933 = vtanh.pop %v931
    %v934 = vmul.f32 %v932, 0.5
    %v935 = vmul.f32 %v933, 0.5
    %v936 = vadd.f32 %v934, 0.5
    %v937 = vadd.f32 %v935, 0.5
    %v938 = vtanh.pop %v929
    %v939 = vmul.f32 %v936, %v755
    %v940 = vmul.f32 %v936, %v938
    %942 = vrot.lane.b32.xlu0 %v940, 64
    %v943 = vpop.permute.xlu0 %942
    %v945 = vadd.f32 %v939, %v943
    %v946 = vtanh.pop %v945
    %v947 = vmul.f32 %v937, %v946
    %949 = vrot.lane.b32.xlu0 %v947, 64
    %v950 = vpop.permute.xlu0 %949
    %v952 = vsel %vm82, %v950, %v851
    %953 = vmatprep.subr.mxu0 %v48
    %954 = vmatpush1.msra.mxu0 %v47
    %955 = vmatprep.subr.mxu0 %v50
    %956 = vmatpush1.msra.mxu0 %v49
    %957 = vmatprep.subr.mxu0 %v52
    %958 = vmatpush1.msra.mxu0 %v51
    %959 = vmatprep.subr.mxu0 %v54
    %960 = vmatpush1.msra.mxu0 %v53
    %961 = vmatprep.subr.mxu0 %v56
    %962 = vmatpush1.msra.mxu0 %v55
    %963 = vmatprep.subr.mxu0 %v58
    %964 = vmatpush1.msra.mxu0 %v57
    %965 = vmatprep.subr.mxu0 %v60
    %966 = vmatpush1.msra.mxu0 %v59
    %967 = vmatprep.subr.mxu0 %v62
    %968 = vmatpush1.msra.mxu0 %v61
    %969 = vmatprep.subr.mxu0 %v64
    %970 = vmatpush1.msra.mxu0 %v63
    %971 = vmatprep.subr.mxu0 %v66
    %972 = vmatpush1.msra.mxu0 %v65
    %973 = vmatprep.subr.mxu0 %v68
    %974 = vmatpush1.msra.mxu0 %v67
    %975 = vmatprep.subr.mxu0 %v70
    %976 = vmatpush1.msra.mxu0 %v69
    %977 = vmatprep.subr.mxu0 %v72
    %978 = vmatpush1.msra.mxu0 %v71
    %979 = vmatprep.subr.mxu0 %v74
    %980 = vmatpush1.msra.mxu0 %v73
    %981 = vmatprep.subr.mxu0 %v76
    %982 = vmatpush1.msra.mxu0 %v75
    %983 = vmatprep.subr.mxu0 %v78
    %984 = vmatpush1.msra.mxu0 %v77
    %985 = vmatprep.subr.mxu0 0.0
    %986 = vmatpush1.msra.mxu0 0.0
    %987 = vmatprep.subr.mxu0 0.0
    %988 = vmatpush1.msra.mxu0 0.0
    %989 = vmatprep.subr.mxu0 0.0
    %990 = vmatpush1.msra.mxu0 0.0
    %991 = vmatprep.subr.mxu0 0.0
    %992 = vmatpush1.msra.mxu0 0.0
    %993 = vmatprep.subr.mxu0 0.0
    %994 = vmatpush1.msra.mxu0 0.0
    %995 = vmatprep.subr.mxu0 0.0
    %996 = vmatpush1.msra.mxu0 0.0
    %997 = vmatprep.subr.mxu0 0.0
    %998 = vmatpush1.msra.mxu0 0.0
    %999 = vmatprep.subr.mxu0 0.0
    %1000 = vmatpush1.msra.mxu0 0.0
    %1001 = vmatprep.subr.mxu0 0.0
    %1002 = vmatpush1.msra.mxu0 0.0
    %1003 = vmatprep.subr.mxu0 0.0
    %1004 = vmatpush1.msra.mxu0 0.0
    %1005 = vmatprep.subr.mxu0 0.0
    %1006 = vmatpush1.msra.mxu0 0.0
    %1007 = vmatprep.subr.mxu0 0.0
    %1008 = vmatpush1.msra.mxu0 0.0
    %1009 = vmatprep.subr.mxu0 0.0
    %1010 = vmatpush1.msra.mxu0 0.0
    %1011 = vmatprep.subr.mxu0 0.0
    %1012 = vmatpush1.msra.mxu0 0.0
    %1013 = vmatprep.subr.mxu0 0.0
    %1014 = vmatpush1.msra.mxu0 0.0
    %1015 = vmatprep.subr.mxu0 0.0
    %1016 = vmatpush1.msra.mxu0 0.0
    %1017 = vmatprep.mubr.f32.mxu0 0.0
    %1018 = vmatmul.mubr.f32.gmra.mrb[0].mxu0 %v952
    %v1019 = vpop.f32.mrb[0].mxu0
    %v1020 = vadd.f32 %v186, %v1019
    %v1021 = vpop.f32.mrb[0].mxu0
    %v1022 = vadd.f32 %v190, %v1021
    %1023 = vdwg.mxu0
    %v1024 = vmul.f32 %v1020, 0.5
    %v1025 = vmul.f32 %v1022, 0.5
    %v1026 = vtanh.pop %v1024
    %v1027 = vtanh.pop %v1025
    %v1028 = vmul.f32 %v1026, 0.5
    %v1029 = vmul.f32 %v1027, 0.5
    %v1030 = vadd.f32 %v1028, 0.5
    %v1031 = vadd.f32 %v1029, 0.5
    %v1032 = vtanh.pop %v1022
    %v1033 = vmul.f32 %v1030, %v849
    %v1034 = vmul.f32 %v1030, %v1032
    %1036 = vrot.lane.b32.xlu0 %v1034, 64
    %v1037 = vpop.permute.xlu0 %1036
    %v1039 = vadd.f32 %v1033, %v1037
    %v1040 = vtanh.pop %v1039
    %v1041 = vmul.f32 %v1031, %v1040
    %s1042 = scalar_lea.vmem %s0, 80
    %v1043 = vld [vmem:[%s1042] sm:$0xff]
    %v1044 = vld [vmem:[%s1042 + $0x8] sm:$0xff]
    %v1045 = vsel %vm82, %v950, 0
    %1047 = vmatprep.subr.mxu0 %v32
    %1048 = vmatpush1.msra.mxu0 %v31
    %1049 = vmatprep.subr.mxu0 %v34
    %1050 = vmatpush1.msra.mxu0 %v33
    %1051 = vmatprep.subr.mxu0 %v36
    %1052 = vmatpush1.msra.mxu0 %v35
    %1053 = vmatprep.subr.mxu0 %v38
    %1054 = vmatpush1.msra.mxu0 %v37
    %1055 = vmatprep.subr.mxu0 %v40
    %1056 = vmatpush1.msra.mxu0 %v39
    %1057 = vmatprep.subr.mxu0 %v42
    %1058 = vmatpush1.msra.mxu0 %v41
    %1059 = vmatprep.subr.mxu0 %v44
    %1060 = vmatpush1.msra.mxu0 %v43
    %1061 = vmatprep.subr.mxu0 %v46
    %1062 = vmatpush1.msra.mxu0 %v45
    %1063 = vmatprep.subr.mxu0 0.0
    %1064 = vmatpush1.msra.mxu0 0.0
    %1065 = vmatprep.subr.mxu0 0.0
    %1066 = vmatpush1.msra.mxu0 0.0
    %1067 = vmatprep.subr.mxu0 0.0
    %1068 = vmatpush1.msra.mxu0 0.0
    %1069 = vmatprep.subr.mxu0 0.0
    %1070 = vmatpush1.msra.mxu0 0.0
    %1071 = vmatprep.subr.mxu0 0.0
    %1072 = vmatpush1.msra.mxu0 0.0
    %1073 = vmatprep.subr.mxu0 0.0
    %1074 = vmatpush1.msra.mxu0 0.0
    %1075 = vmatprep.subr.mxu0 0.0
    %1076 = vmatpush1.msra.mxu0 0.0
    %1077 = vmatprep.subr.mxu0 0.0
    %1078 = vmatpush1.msra.mxu0 0.0
    %1079 = vmatprep.subr.mxu0 0.0
    %1080 = vmatpush1.msra.mxu0 0.0
    %1081 = vmatprep.subr.mxu0 0.0
    %1082 = vmatpush1.msra.mxu0 0.0
    %1083 = vmatprep.subr.mxu0 0.0
    %1084 = vmatpush1.msra.mxu0 0.0
    %1085 = vmatprep.subr.mxu0 0.0
    %1086 = vmatpush1.msra.mxu0 0.0
    %1087 = vmatprep.subr.mxu0 0.0
    %1088 = vmatpush1.msra.mxu0 0.0
    %1089 = vmatprep.subr.mxu0 0.0
    %1090 = vmatpush1.msra.mxu0 0.0
    %1091 = vmatprep.subr.mxu0 0.0
    %1092 = vmatpush1.msra.mxu0 0.0
    %1093 = vmatprep.subr.mxu0 0.0
    %1094 = vmatpush1.msra.mxu0 0.0
    %1095 = vmatprep.subr.mxu0 0.0
    %1096 = vmatpush1.msra.mxu0 0.0
    %1097 = vmatprep.subr.mxu0 0.0
    %1098 = vmatpush1.msra.mxu0 0.0
    %1099 = vmatprep.subr.mxu0 0.0
    %1100 = vmatpush1.msra.mxu0 0.0
    %1101 = vmatprep.subr.mxu0 0.0
    %1102 = vmatpush1.msra.mxu0 0.0
    %1103 = vmatprep.subr.mxu0 0.0
    %1104 = vmatpush1.msra.mxu0 0.0
    %1105 = vmatprep.subr.mxu0 0.0
    %1106 = vmatpush1.msra.mxu0 0.0
    %1107 = vmatprep.subr.mxu0 0.0
    %1108 = vmatpush1.msra.mxu0 0.0
    %1109 = vmatprep.subr.mxu0 0.0
    %1110 = vmatpush1.msra.mxu0 0.0
    %1111 = vmatprep.mubr.f32.mxu0 0.0
    %1112 = vmatmul.mubr.f32.gmra.mrb[0].mxu0 %v1045
    %v1113 = vpop.f32.mrb[0].mxu0
    %v1114 = vadd.f32 0.0, %v1113
    %v1115 = vpop.f32.mrb[0].mxu0
    %v1116 = vadd.f32 0.0, %v1115
    %1117 = vdwg.mxu0
    %v1118 = vadd.f32 %v1043, %v1114
    %v1119 = vadd.f32 %v1044, %v1116
    %v1120 = vmul.f32 %v1118, 0.5
    %v1121 = vmul.f32 %v1119, 0.5
    %v1122 = vtanh.pop %v1120
    %v1123 = vtanh.pop %v1121
    %v1124 = vmul.f32 %v1122, 0.5
    %v1125 = vmul.f32 %v1123, 0.5
    %v1126 = vadd.f32 %v1124, 0.5
    %v1127 = vadd.f32 %v1125, 0.5
    %v1128 = vtanh.pop %v1119
    %v1129 = vmul.f32 %v1126, %v945
    %v1130 = vmul.f32 %v1126, %v1128
    %1132 = vrot.lane.b32.xlu0 %v1130, 64
    %v1133 = vpop.permute.xlu0 %1132
    %v1135 = vadd.f32 %v1129, %v1133
    %v1136 = vtanh.pop %v1135
    %v1137 = vmul.f32 %v1127, %v1136
    %1139 = vrot.lane.b32.xlu0 %v1137, 64
    %v1140 = vpop.permute.xlu0 %1139
    %v1142 = vsel %vm82, %v1140, %v1041
    %1143 = vmatprep.subr.mxu0 %v48
    %1144 = vmatpush1.msra.mxu0 %v47
    %1145 = vmatprep.subr.mxu0 %v50
    %1146 = vmatpush1.msra.mxu0 %v49
    %1147 = vmatprep.subr.mxu0 %v52
    %1148 = vmatpush1.msra.mxu0 %v51
    %1149 = vmatprep.subr.mxu0 %v54
    %1150 = vmatpush1.msra.mxu0 %v53
    %1151 = vmatprep.subr.mxu0 %v56
    %1152 = vmatpush1.msra.mxu0 %v55
    %1153 = vmatprep.subr.mxu0 %v58
    %1154 = vmatpush1.msra.mxu0 %v57
    %1155 = vmatprep.subr.mxu0 %v60
    %1156 = vmatpush1.msra.mxu0 %v59
    %1157 = vmatprep.subr.mxu0 %v62
    %1158 = vmatpush1.msra.mxu0 %v61
    %1159 = vmatprep.subr.mxu0 %v64
    %1160 = vmatpush1.msra.mxu0 %v63
    %1161 = vmatprep.subr.mxu0 %v66
    %1162 = vmatpush1.msra.mxu0 %v65
    %1163 = vmatprep.subr.mxu0 %v68
    %1164 = vmatpush1.msra.mxu0 %v67
    %1165 = vmatprep.subr.mxu0 %v70
    %1166 = vmatpush1.msra.mxu0 %v69
    %1167 = vmatprep.subr.mxu0 %v72
    %1168 = vmatpush1.msra.mxu0 %v71
    %1169 = vmatprep.subr.mxu0 %v74
    %1170 = vmatpush1.msra.mxu0 %v73
    %1171 = vmatprep.subr.mxu0 %v76
    %1172 = vmatpush1.msra.mxu0 %v75
    %1173 = vmatprep.subr.mxu0 %v78
    %1174 = vmatpush1.msra.mxu0 %v77
    %1175 = vmatprep.subr.mxu0 0.0
    %1176 = vmatpush1.msra.mxu0 0.0
    %1177 = vmatprep.subr.mxu0 0.0
    %1178 = vmatpush1.msra.mxu0 0.0
    %1179 = vmatprep.subr.mxu0 0.0
    %1180 = vmatpush1.msra.mxu0 0.0
    %1181 = vmatprep.subr.mxu0 0.0
    %1182 = vmatpush1.msra.mxu0 0.0
    %1183 = vmatprep.subr.mxu0 0.0
    %1184 = vmatpush1.msra.mxu0 0.0
    %1185 = vmatprep.subr.mxu0 0.0
    %1186 = vmatpush1.msra.mxu0 0.0
    %1187 = vmatprep.subr.mxu0 0.0
    %1188 = vmatpush1.msra.mxu0 0.0
    %1189 = vmatprep.subr.mxu0 0.0
    %1190 = vmatpush1.msra.mxu0 0.0
    %1191 = vmatprep.subr.mxu0 0.0
    %1192 = vmatpush1.msra.mxu0 0.0
    %1193 = vmatprep.subr.mxu0 0.0
    %1194 = vmatpush1.msra.mxu0 0.0
    %1195 = vmatprep.subr.mxu0 0.0
    %1196 = vmatpush1.msra.mxu0 0.0
    %1197 = vmatprep.subr.mxu0 0.0
    %1198 = vmatpush1.msra.mxu0 0.0
    %1199 = vmatprep.subr.mxu0 0.0
    %1200 = vmatpush1.msra.mxu0 0.0
    %1201 = vmatprep.subr.mxu0 0.0
    %1202 = vmatpush1.msra.mxu0 0.0
    %1203 = vmatprep.subr.mxu0 0.0
    %1204 = vmatpush1.msra.mxu0 0.0
    %1205 = vmatprep.subr.mxu0 0.0
    %1206 = vmatpush1.msra.mxu0 0.0
    %1207 = vmatprep.mubr.f32.mxu0 0.0
    %1208 = vmatmul.mubr.f32.gmra.mrb[0].mxu0 %v1142
    %v1209 = vpop.f32.mrb[0].mxu0
    %v1210 = vadd.f32 %v186, %v1209
    %v1211 = vpop.f32.mrb[0].mxu0
    %v1212 = vadd.f32 %v190, %v1211
    %1213 = vdwg.mxu0
    %v1214 = vmul.f32 %v1210, 0.5
    %v1215 = vmul.f32 %v1212, 0.5
    %v1216 = vtanh.pop %v1214
    %v1217 = vtanh.pop %v1215
    %v1218 = vmul.f32 %v1216, 0.5
    %v1219 = vmul.f32 %v1217, 0.5
    %v1220 = vadd.f32 %v1218, 0.5
    %v1221 = vadd.f32 %v1219, 0.5
    %v1222 = vtanh.pop %v1212
    %v1223 = vmul.f32 %v1220, %v1039
    %v1224 = vmul.f32 %v1220, %v1222
    %1226 = vrot.lane.b32.xlu0 %v1224, 64
    %v1227 = vpop.permute.xlu0 %1226
    %v1229 = vadd.f32 %v1223, %v1227
    %v1230 = vtanh.pop %v1229
    %v1231 = vmul.f32 %v1221, %v1230
    %s1232 = scalar_lea.vmem %s0, 96
    %v1233 = vld [vmem:[%s1232] sm:$0xff]
    %v1234 = vld [vmem:[%s1232 + $0x8] sm:$0xff]
    %v1235 = vsel %vm82, %v1140, 0
    %1237 = vmatprep.subr.mxu0 %v32
    %1238 = vmatpush1.msra.mxu0 %v31
    %1239 = vmatprep.subr.mxu0 %v34
    %1240 = vmatpush1.msra.mxu0 %v33
    %1241 = vmatprep.subr.mxu0 %v36
    %1242 = vmatpush1.msra.mxu0 %v35
    %1243 = vmatprep.subr.mxu0 %v38
    %1244 = vmatpush1.msra.mxu0 %v37
    %1245 = vmatprep.subr.mxu0 %v40
    %1246 = vmatpush1.msra.mxu0 %v39
    %1247 = vmatprep.subr.mxu0 %v42
    %1248 = vmatpush1.msra.mxu0 %v41
    %1249 = vmatprep.subr.mxu0 %v44
    %1250 = vmatpush1.msra.mxu0 %v43
    %1251 = vmatprep.subr.mxu0 %v46
    %1252 = vmatpush1.msra.mxu0 %v45
    %1253 = vmatprep.subr.mxu0 0.0
    %1254 = vmatpush1.msra.mxu0 0.0
    %1255 = vmatprep.subr.mxu0 0.0
    %1256 = vmatpush1.msra.mxu0 0.0
    %1257 = vmatprep.subr.mxu0 0.0
    %1258 = vmatpush1.msra.mxu0 0.0
    %1259 = vmatprep.subr.mxu0 0.0
    %1260 = vmatpush1.msra.mxu0 0.0
    %1261 = vmatprep.subr.mxu0 0.0
    %1262 = vmatpush1.msra.mxu0 0.0
    %1263 = vmatprep.subr.mxu0 0.0
    %1264 = vmatpush1.msra.mxu0 0.0
    %1265 = vmatprep.subr.mxu0 0.0
    %1266 = vmatpush1.msra.mxu0 0.0
    %1267 = vmatprep.subr.mxu0 0.0
    %1268 = vmatpush1.msra.mxu0 0.0
    %1269 = vmatprep.subr.mxu0 0.0
    %1270 = vmatpush1.msra.mxu0 0.0
    %1271 = vmatprep.subr.mxu0 0.0
    %1272 = vmatpush1.msra.mxu0 0.0
    %1273 = vmatprep.subr.mxu0 0.0
    %1274 = vmatpush1.msra.mxu0 0.0
    %1275 = vmatprep.subr.mxu0 0.0
    %1276 = vmatpush1.msra.mxu0 0.0
    %1277 = vmatprep.subr.mxu0 0.0
    %1278 = vmatpush1.msra.mxu0 0.0
    %1279 = vmatprep.subr.mxu0 0.0
    %1280 = vmatpush1.msra.mxu0 0.0
    %1281 = vmatprep.subr.mxu0 0.0
    %1282 = vmatpush1.msra.mxu0 0.0
    %1283 = vmatprep.subr.mxu0 0.0
    %1284 = vmatpush1.msra.mxu0 0.0
    %1285 = vmatprep.subr.mxu0 0.0
    %1286 = vmatpush1.msra.mxu0 0.0
    %1287 = vmatprep.subr.mxu0 0.0
    %1288 = vmatpush1.msra.mxu0 0.0
    %1289 = vmatprep.subr.mxu0 0.0
    %1290 = vmatpush1.msra.mxu0 0.0
    %1291 = vmatprep.subr.mxu0 0.0
    %1292 = vmatpush1.msra.mxu0 0.0
    %1293 = vmatprep.subr.mxu0 0.0
    %1294 = vmatpush1.msra.mxu0 0.0
    %1295 = vmatprep.subr.mxu0 0.0
    %1296 = vmatpush1.msra.mxu0 0.0
    %1297 = vmatprep.subr.mxu0 0.0
    %1298 = vmatpush1.msra.mxu0 0.0
    %1299 = vmatprep.subr.mxu0 0.0
    %1300 = vmatpush1.msra.mxu0 0.0
    %1301 = vmatprep.mubr.f32.mxu0 0.0
    %1302 = vmatmul.mubr.f32.gmra.mrb[0].mxu0 %v1235
    %v1303 = vpop.f32.mrb[0].mxu0
    %v1304 = vadd.f32 0.0, %v1303
    %v1305 = vpop.f32.mrb[0].mxu0
    %v1306 = vadd.f32 0.0, %v1305
    %1307 = vdwg.mxu0
    %v1308 = vadd.f32 %v1233, %v1304
    %v1309 = vadd.f32 %v1234, %v1306
    %v1310 = vmul.f32 %v1308, 0.5
    %v1311 = vmul.f32 %v1309, 0.5
    %v1312 = vtanh.pop %v1310
    %v1313 = vtanh.pop %v1311
    %v1314 = vmul.f32 %v1312, 0.5
    %v1315 = vmul.f32 %v1313, 0.5
    %v1316 = vadd.f32 %v1314, 0.5
    %v1317 = vadd.f32 %v1315, 0.5
    %v1318 = vtanh.pop %v1309
    %v1319 = vmul.f32 %v1316, %v1135
    %v1320 = vmul.f32 %v1316, %v1318
    %1322 = vrot.lane.b32.xlu0 %v1320, 64
    %v1323 = vpop.permute.xlu0 %1322
    %v1325 = vadd.f32 %v1319, %v1323
    %v1326 = vtanh.pop %v1325
    %v1327 = vmul.f32 %v1317, %v1326
    %1329 = vrot.lane.b32.xlu0 %v1327, 64
    %v1330 = vpop.permute.xlu0 %1329
    %v1332 = vsel %vm82, %v1330, %v1231
    %1333 = vmatprep.subr.mxu0 %v48
    %1334 = vmatpush1.msra.mxu0 %v47
    %1335 = vmatprep.subr.mxu0 %v50
    %1336 = vmatpush1.msra.mxu0 %v49
    %1337 = vmatprep.subr.mxu0 %v52
    %1338 = vmatpush1.msra.mxu0 %v51
    %1339 = vmatprep.subr.mxu0 %v54
    %1340 = vmatpush1.msra.mxu0 %v53
    %1341 = vmatprep.subr.mxu0 %v56
    %1342 = vmatpush1.msra.mxu0 %v55
    %1343 = vmatprep.subr.mxu0 %v58
    %1344 = vmatpush1.msra.mxu0 %v57
    %1345 = vmatprep.subr.mxu0 %v60
    %1346 = vmatpush1.msra.mxu0 %v59
    %1347 = vmatprep.subr.mxu0 %v62
    %1348 = vmatpush1.msra.mxu0 %v61
    %1349 = vmatprep.subr.mxu0 %v64
    %1350 = vmatpush1.msra.mxu0 %v63
    %1351 = vmatprep.subr.mxu0 %v66
    %1352 = vmatpush1.msra.mxu0 %v65
    %1353 = vmatprep.subr.mxu0 %v68
    %1354 = vmatpush1.msra.mxu0 %v67
    %1355 = vmatprep.subr.mxu0 %v70
    %1356 = vmatpush1.msra.mxu0 %v69
    %1357 = vmatprep.subr.mxu0 %v72
    %1358 = vmatpush1.msra.mxu0 %v71
    %1359 = vmatprep.subr.mxu0 %v74
    %1360 = vmatpush1.msra.mxu0 %v73
    %1361 = vmatprep.subr.mxu0 %v76
    %1362 = vmatpush1.msra.mxu0 %v75
    %1363 = vmatprep.subr.mxu0 %v78
    %1364 = vmatpush1.msra.mxu0 %v77
    %1365 = vmatprep.subr.mxu0 0.0
    %1366 = vmatpush1.msra.mxu0 0.0
    %1367 = vmatprep.subr.mxu0 0.0
    %1368 = vmatpush1.msra.mxu0 0.0
    %1369 = vmatprep.subr.mxu0 0.0
    %1370 = vmatpush1.msra.mxu0 0.0
    %1371 = vmatprep.subr.mxu0 0.0
    %1372 = vmatpush1.msra.mxu0 0.0
    %1373 = vmatprep.subr.mxu0 0.0
    %1374 = vmatpush1.msra.mxu0 0.0
    %1375 = vmatprep.subr.mxu0 0.0
    %1376 = vmatpush1.msra.mxu0 0.0
    %1377 = vmatprep.subr.mxu0 0.0
    %1378 = vmatpush1.msra.mxu0 0.0
    %1379 = vmatprep.subr.mxu0 0.0
    %1380 = vmatpush1.msra.mxu0 0.0
    %1381 = vmatprep.subr.mxu0 0.0
    %1382 = vmatpush1.msra.mxu0 0.0
    %1383 = vmatprep.subr.mxu0 0.0
    %1384 = vmatpush1.msra.mxu0 0.0
    %1385 = vmatprep.subr.mxu0 0.0
    %1386 = vmatpush1.msra.mxu0 0.0
    %1387 = vmatprep.subr.mxu0 0.0
    %1388 = vmatpush1.msra.mxu0 0.0
    %1389 = vmatprep.subr.mxu0 0.0
    %1390 = vmatpush1.msra.mxu0 0.0
    %1391 = vmatprep.subr.mxu0 0.0
    %1392 = vmatpush1.msra.mxu0 0.0
    %1393 = vmatprep.subr.mxu0 0.0
    %1394 = vmatpush1.msra.mxu0 0.0
    %1395 = vmatprep.subr.mxu0 0.0
    %1396 = vmatpush1.msra.mxu0 0.0
    %1397 = vmatprep.mubr.f32.mxu0 0.0
    %1398 = vmatmul.mubr.f32.gmra.mrb[0].mxu0 %v1332
    %v1399 = vpop.f32.mrb[0].mxu0
    %v1400 = vadd.f32 %v186, %v1399
    %v1401 = vpop.f32.mrb[0].mxu0
    %v1402 = vadd.f32 %v190, %v1401
    %1403 = vdwg.mxu0
    %v1404 = vmul.f32 %v1400, 0.5
    %v1405 = vmul.f32 %v1402, 0.5
    %v1406 = vtanh.pop %v1404
    %v1407 = vtanh.pop %v1405
    %v1408 = vmul.f32 %v1406, 0.5
    %v1409 = vmul.f32 %v1407, 0.5
    %v1410 = vadd.f32 %v1408, 0.5
    %v1411 = vadd.f32 %v1409, 0.5
    %v1412 = vtanh.pop %v1402
    %v1413 = vmul.f32 %v1410, %v1229
    %v1414 = vmul.f32 %v1410, %v1412
    %1416 = vrot.lane.b32.xlu0 %v1414, 64
    %v1417 = vpop.permute.xlu0 %1416
    %v1419 = vadd.f32 %v1413, %v1417
    %v1420 = vtanh.pop %v1419
    %v1421 = vmul.f32 %v1411, %v1420
    %s1422 = scalar_lea.vmem %s0, 112
    %v1423 = vld [vmem:[%s1422] sm:$0xff]
    %v1424 = vld [vmem:[%s1422 + $0x8] sm:$0xff]
    %v1425 = vsel %vm82, %v1330, 0
    %1427 = vmatprep.subr.mxu0 %v32
    %1428 = vmatpush1.msra.mxu0 %v31
    %1429 = vmatprep.subr.mxu0 %v34
    %1430 = vmatpush1.msra.mxu0 %v33
    %1431 = vmatprep.subr.mxu0 %v36
    %1432 = vmatpush1.msra.mxu0 %v35
    %1433 = vmatprep.subr.mxu0 %v38
    %1434 = vmatpush1.msra.mxu0 %v37
    %1435 = vmatprep.subr.mxu0 %v40
    %1436 = vmatpush1.msra.mxu0 %v39
    %1437 = vmatprep.subr.mxu0 %v42
    %1438 = vmatpush1.msra.mxu0 %v41
    %1439 = vmatprep.subr.mxu0 %v44
    %1440 = vmatpush1.msra.mxu0 %v43
    %1441 = vmatprep.subr.mxu0 %v46
    %1442 = vmatpush1.msra.mxu0 %v45
    %1443 = vmatprep.subr.mxu0 0.0
    %1444 = vmatpush1.msra.mxu0 0.0
    %1445 = vmatprep.subr.mxu0 0.0
    %1446 = vmatpush1.msra.mxu0 0.0
    %1447 = vmatprep.subr.mxu0 0.0
    %1448 = vmatpush1.msra.mxu0 0.0
    %1449 = vmatprep.subr.mxu0 0.0
    %1450 = vmatpush1.msra.mxu0 0.0
    %1451 = vmatprep.subr.mxu0 0.0
    %1452 = vmatpush1.msra.mxu0 0.0
    %1453 = vmatprep.subr.mxu0 0.0
    %1454 = vmatpush1.msra.mxu0 0.0
    %1455 = vmatprep.subr.mxu0 0.0
    %1456 = vmatpush1.msra.mxu0 0.0
    %1457 = vmatprep.subr.mxu0 0.0
    %1458 = vmatpush1.msra.mxu0 0.0
    %1459 = vmatprep.subr.mxu0 0.0
    %1460 = vmatpush1.msra.mxu0 0.0
    %1461 = vmatprep.subr.mxu0 0.0
    %1462 = vmatpush1.msra.mxu0 0.0
    %1463 = vmatprep.subr.mxu0 0.0
    %1464 = vmatpush1.msra.mxu0 0.0
    %1465 = vmatprep.subr.mxu0 0.0
    %1466 = vmatpush1.msra.mxu0 0.0
    %1467 = vmatprep.subr.mxu0 0.0
    %1468 = vmatpush1.msra.mxu0 0.0
    %1469 = vmatprep.subr.mxu0 0.0
    %1470 = vmatpush1.msra.mxu0 0.0
    %1471 = vmatprep.subr.mxu0 0.0
    %1472 = vmatpush1.msra.mxu0 0.0
    %1473 = vmatprep.subr.mxu0 0.0
    %1474 = vmatpush1.msra.mxu0 0.0
    %1475 = vmatprep.subr.mxu0 0.0
    %1476 = vmatpush1.msra.mxu0 0.0
    %1477 = vmatprep.subr.mxu0 0.0
    %1478 = vmatpush1.msra.mxu0 0.0
    %1479 = vmatprep.subr.mxu0 0.0
    %1480 = vmatpush1.msra.mxu0 0.0
    %1481 = vmatprep.subr.mxu0 0.0
    %1482 = vmatpush1.msra.mxu0 0.0
    %1483 = vmatprep.subr.mxu0 0.0
    %1484 = vmatpush1.msra.mxu0 0.0
    %1485 = vmatprep.subr.mxu0 0.0
    %1486 = vmatpush1.msra.mxu0 0.0
    %1487 = vmatprep.subr.mxu0 0.0
    %1488 = vmatpush1.msra.mxu0 0.0
    %1489 = vmatprep.subr.mxu0 0.0
    %1490 = vmatpush1.msra.mxu0 0.0
    %1491 = vmatprep.mubr.f32.mxu0 0.0
    %1492 = vmatmul.mubr.f32.gmra.mrb[0].mxu0 %v1425
    %v1493 = vpop.f32.mrb[0].mxu0
    %v1494 = vadd.f32 0.0, %v1493
    %v1495 = vpop.f32.mrb[0].mxu0
    %v1496 = vadd.f32 0.0, %v1495
    %1497 = vdwg.mxu0
    %v1498 = vadd.f32 %v1423, %v1494
    %v1499 = vadd.f32 %v1424, %v1496
    %v1500 = vmul.f32 %v1498, 0.5
    %v1501 = vmul.f32 %v1499, 0.5
    %v1502 = vtanh.pop %v1500
    %v1503 = vtanh.pop %v1501
    %v1504 = vmul.f32 %v1502, 0.5
    %v1505 = vmul.f32 %v1503, 0.5
    %v1506 = vadd.f32 %v1504, 0.5
    %v1507 = vadd.f32 %v1505, 0.5
    %v1508 = vtanh.pop %v1499
    %v1509 = vmul.f32 %v1506, %v1325
    %v1510 = vmul.f32 %v1506, %v1508
    %1512 = vrot.lane.b32.xlu0 %v1510, 64
    %v1513 = vpop.permute.xlu0 %1512
    %v1515 = vadd.f32 %v1509, %v1513
    %v1516 = vtanh.pop %v1515
    %v1517 = vmul.f32 %v1507, %v1516
    %1519 = vrot.lane.b32.xlu0 %v1517, 64
    %v1520 = vpop.permute.xlu0 %1519
    %v1522 = vsel %vm82, %v1520, %v1421
    %1523 = vmatprep.subr.mxu0 %v48
    %1524 = vmatpush1.msra.mxu0 %v47
    %1525 = vmatprep.subr.mxu0 %v50
    %1526 = vmatpush1.msra.mxu0 %v49
    %1527 = vmatprep.subr.mxu0 %v52
    %1528 = vmatpush1.msra.mxu0 %v51
    %1529 = vmatprep.subr.mxu0 %v54
    %1530 = vmatpush1.msra.mxu0 %v53
    %1531 = vmatprep.subr.mxu0 %v56
    %1532 = vmatpush1.msra.mxu0 %v55
    %1533 = vmatprep.subr.mxu0 %v58
    %1534 = vmatpush1.msra.mxu0 %v57
    %1535 = vmatprep.subr.mxu0 %v60
    %1536 = vmatpush1.msra.mxu0 %v59
    %1537 = vmatprep.subr.mxu0 %v62
    %1538 = vmatpush1.msra.mxu0 %v61
    %1539 = vmatprep.subr.mxu0 %v64
    %1540 = vmatpush1.msra.mxu0 %v63
    %1541 = vmatprep.subr.mxu0 %v66
    %1542 = vmatpush1.msra.mxu0 %v65
    %1543 = vmatprep.subr.mxu0 %v68
    %1544 = vmatpush1.msra.mxu0 %v67
    %1545 = vmatprep.subr.mxu0 %v70
    %1546 = vmatpush1.msra.mxu0 %v69
    %1547 = vmatprep.subr.mxu0 %v72
    %1548 = vmatpush1.msra.mxu0 %v71
    %1549 = vmatprep.subr.mxu0 %v74
    %1550 = vmatpush1.msra.mxu0 %v73
    %1551 = vmatprep.subr.mxu0 %v76
    %1552 = vmatpush1.msra.mxu0 %v75
    %1553 = vmatprep.subr.mxu0 %v78
    %1554 = vmatpush1.msra.mxu0 %v77
    %1555 = vmatprep.subr.mxu0 0.0
    %1556 = vmatpush1.msra.mxu0 0.0
    %1557 = vmatprep.subr.mxu0 0.0
    %1558 = vmatpush1.msra.mxu0 0.0
    %1559 = vmatprep.subr.mxu0 0.0
    %1560 = vmatpush1.msra.mxu0 0.0
    %1561 = vmatprep.subr.mxu0 0.0
    %1562 = vmatpush1.msra.mxu0 0.0
    %1563 = vmatprep.subr.mxu0 0.0
    %1564 = vmatpush1.msra.mxu0 0.0
    %1565 = vmatprep.subr.mxu0 0.0
    %1566 = vmatpush1.msra.mxu0 0.0
    %1567 = vmatprep.subr.mxu0 0.0
    %1568 = vmatpush1.msra.mxu0 0.0
    %1569 = vmatprep.subr.mxu0 0.0
    %1570 = vmatpush1.msra.mxu0 0.0
    %1571 = vmatprep.subr.mxu0 0.0
    %1572 = vmatpush1.msra.mxu0 0.0
    %1573 = vmatprep.subr.mxu0 0.0
    %1574 = vmatpush1.msra.mxu0 0.0
    %1575 = vmatprep.subr.mxu0 0.0
    %1576 = vmatpush1.msra.mxu0 0.0
    %1577 = vmatprep.subr.mxu0 0.0
    %1578 = vmatpush1.msra.mxu0 0.0
    %1579 = vmatprep.subr.mxu0 0.0
    %1580 = vmatpush1.msra.mxu0 0.0
    %1581 = vmatprep.subr.mxu0 0.0
    %1582 = vmatpush1.msra.mxu0 0.0
    %1583 = vmatprep.subr.mxu0 0.0
    %1584 = vmatpush1.msra.mxu0 0.0
    %1585 = vmatprep.subr.mxu0 0.0
    %1586 = vmatpush1.msra.mxu0 0.0
    %1587 = vmatprep.mubr.f32.mxu0 0.0
    %1588 = vmatmul.mubr.f32.gmra.mrb[0].mxu0 %v1522
    %v1589 = vpop.f32.mrb[0].mxu0
    %v1590 = vadd.f32 %v186, %v1589
    %v1591 = vpop.f32.mrb[0].mxu0
    %v1592 = vadd.f32 %v190, %v1591
    %1593 = vdwg.mxu0
    %v1594 = vmul.f32 %v1590, 0.5
    %v1595 = vmul.f32 %v1592, 0.5
    %v1596 = vtanh.pop %v1594
    %v1597 = vtanh.pop %v1595
    %v1598 = vmul.f32 %v1596, 0.5
    %v1599 = vmul.f32 %v1597, 0.5
    %v1600 = vadd.f32 %v1598, 0.5
    %v1601 = vadd.f32 %v1599, 0.5
    %v1602 = vtanh.pop %v1592
    %v1603 = vmul.f32 %v1600, %v1419
    %v1604 = vmul.f32 %v1600, %v1602
    %1606 = vrot.lane.b32.xlu0 %v1604, 64
    %v1607 = vpop.permute.xlu0 %1606
    %v1609 = vadd.f32 %v1603, %v1607
    %v1610 = vtanh.pop %v1609
    %v1611 = vmul.f32 %v1601, %v1610
    %1613 = vrot.lane.b32.xlu0 %v1611, 64
    %v1614 = vpop.permute.xlu0 %1613
    %1616 = vst.msk [vmem:[%s4] sm:$0xff] %vm82, %v1614
    // Predicated region
    $region22: #{lstm_forward.1} parent=1 // pred_check
      _
    $region23: #{lstm_forward.1} parent=1 // pred_check_branch
      %1618 = sbr.rel (0) target = $region25
    $region24: #{lstm_forward.1} parent=1 // pred_region
      _
    $region25: #{lstm_forward.1} parent=1 // pred_fallthru
      _
    // Predicated region
    $region26: #{lstm_forward.1} parent=1 // pred_check
      _
    $region27: #{lstm_forward.1} parent=1 // pred_check_branch
      %1620 = sbr.rel (0) target = $region29
    $region28: #{lstm_forward.1} parent=1 // pred_region
      _
    $region29: #{lstm_forward.1} parent=1 // pred_fallthru
      _
    %1621 = vsyncpa [#allocation3], 1

</llo_original>
